<compile_context>
chip_gen: v6e
topology: v6e:2x2x1
jax: 0.10.0
libtpu: 0.0.40
codegen_flags: <defaults>
</compile_context>

<pallas_src>
import functools

import jax
import jax.numpy as jnp
from jax import lax
from jax.experimental import pallas as pl
from jax.experimental.pallas import tpu as pltpu

# ---- module constants (from GPT/mathgpt.py) ----
N_EMBED = 256
N_HEADS = 4
HEAD_SIZE = N_EMBED // N_HEADS  # 64

# Large finite negative instead of -inf: avoids exp(-inf - -inf) = NaN if this
# kernel is ever reused with padding / arbitrary masks; exp() underflows to 0.
_NEG_INF = -1e30


def _mha_kernel(x_ref, wqkv_ref, wproj_ref, bproj_ref, o_ref,
                qkv_s, m_s, l_s, acc_s,
                *, n_heads, head_dim, block_kv, n_kv, approx_recip):
    """Grid step = (batch tile, KV block).  Online-softmax causal attention."""
    Bt, T, C = x_ref.shape
    H, D, tk = n_heads, head_dim, block_kv
    HD = H * D
    cdt = x_ref.dtype                        # MXU compute dtype (f32 or bf16)
    kv = pl.program_id(1)

    # ---- once per batch tile: fused QKV projection + online-softmax init ----
    @pl.when(kv == 0)
    def _init():
        x2d = x_ref[...].reshape(Bt * T, C)
        # One lane-dense (Bt*T, C) @ (C, 3*H*D) matmul, f32 accumulation on the
        # MXU; materialize the slab in the compute dtype (round once).
        qkv = jnp.dot(x2d, wqkv_ref[...], preferred_element_type=jnp.float32)
        qkv_s[...] = qkv.astype(cdt).reshape(Bt, T, 3 * HD)
        m_s[...] = jnp.full_like(m_s, _NEG_INF)
        l_s[...] = jnp.zeros_like(l_s)
        acc_s[...] = jnp.zeros_like(acc_s)

    kv_lo = pl.multiple_of(kv * tk, tk)

    # Causal mask for this KV block: query index vs absolute key index.
    q_row = lax.broadcasted_iota(jnp.int32, (T, tk), 0)
    k_col = lax.broadcasted_iota(jnp.int32, (T, tk), 1) + kv_lo
    causal = (q_row >= k_col)[None, :, :]            # (1, T, tk)

    # ---- per KV block: online softmax, static unroll over heads ----
    for h in range(H):
        q = qkv_s[:, :, h * D:(h + 1) * D]                               # (Bt,T,D)
        k = qkv_s[:, pl.ds(kv_lo, tk), HD + h * D:HD + (h + 1) * D]      # (Bt,tk,D)
        v = qkv_s[:, pl.ds(kv_lo, tk), 2 * HD + h * D:2 * HD + (h + 1) * D]

        # Scale already folded into the Q columns of wqkv; scores in f32.
        s = jnp.einsum('bqd,bkd->bqk', q, k,
                       preferred_element_type=jnp.float32)
        s = jnp.where(causal, s, _NEG_INF)

        m_prev = m_s[h]                                      # (Bt, T, 1) f32
        m_new = jnp.maximum(m_prev, jnp.max(s, axis=-1, keepdims=True))
        alpha = jnp.exp(m_prev - m_new)
        p = jnp.exp(s - m_new)                               # unnormalized
        l_s[h] = alpha * l_s[h] + jnp.sum(p, axis=-1, keepdims=True,
                                          dtype=jnp.float32)
        acc_s[h] = alpha * acc_s[h] + jnp.einsum(
            'bqk,bkd->bqd', p.astype(cdt), v,
            preferred_element_type=jnp.float32)
        m_s[h] = m_new

    # ---- finalize: deferred normalization + fused output projection ----
    @pl.when(kv == n_kv - 1)
    def _finalize():
        heads = []
        for h in range(H):
            inv_l = pl.reciprocal(l_s[h], approx=approx_recip)   # (Bt, T, 1)
            heads.append((acc_s[h] * inv_l).reshape(Bt * T, D))
        # Lane concat of four 64-lane slabs, then one K=256 projection matmul.
        att = jnp.concatenate(heads, axis=-1).astype(cdt)        # (Bt*T, H*D)
        out = jnp.dot(att, wproj_ref[...], preferred_element_type=jnp.float32)
        out = out + bproj_ref[...].astype(jnp.float32)
        o_ref[...] = out.reshape(Bt, T, C).astype(o_ref.dtype)


def _pick_block_batch(B, T, target_rows=256):
    """Batch elems per grid step: ~256 rows (MXU M-fill on v6e/v7x, ~128 is
    enough on v5e) while keeping >= 2 steps on the parallel axis when B >= 2
    (v7x dual-TC).  Must divide B."""
    bt = min(B, max(1, -(-target_rows // T)))      # min(B, ceil(target/T))
    if B >= 2:
        bt = max(1, min(bt, B // 2))
    while B % bt:
        bt -= 1
    return bt


def _pick_block_kv(T, block_kv):
    """KV block size: flash tile of <= 512 keys; must divide T."""
    if block_kv is None:
        block_kv = 512
    block_kv = min(block_kv, T)
    while T % block_kv:
        block_kv -= 1
    return block_kv


@functools.partial(jax.jit, static_argnames=("block_kv",))
def multi_head_attention(x, wq, wk, wv, w_proj, b_proj, *, block_kv=None):
    """x: (B, T, C); wq/wk/wv: (H, C, D); w_proj: (H*D, C); b_proj: (1, C).

    Matmuls run in x.dtype (pass bf16 inputs for the bf16 MXU path); softmax
    and accumulation are f32; output dtype == x.dtype.
    """
    B, T, C = x.shape
    H, _, D = wq.shape
    cdt = x.dtype

    # Pack per-head weights into fused, MXU-friendly layouts (cheap XLA ops,
    # outside the kernel).  Columns are head-major, matching the per-head
    # slices and the PyTorch torch.cat([...], dim=-1) feature order.
    def _flat(w):                                   # (H, C, D) -> (C, H*D)
        return jnp.transpose(w, (1, 0, 2)).reshape(C, H * D)

    # Fold the 1/sqrt(D) attention scale into the Q columns (exact for D=64).
    wqkv = jnp.concatenate(
        [_flat(wq) * (D ** -0.5), _flat(wk), _flat(wv)], axis=1).astype(cdt)
    wproj = w_proj.astype(cdt)                      # (H*D, C), original layout
    bproj = b_proj.astype(cdt)                      # (1, C)

    Bt = _pick_block_batch(B, T)
    tk = _pick_block_kv(T, block_kv)
    n_kv = T // tk
    rows = Bt * T

    kernel = functools.partial(
        _mha_kernel, n_heads=H, head_dim=D, block_kv=tk, n_kv=n_kv,
        approx_recip=(cdt == jnp.bfloat16))

    # Explicit VMEM budget (x/out blocks double-buffered, weights, scratch,
    # live score/projection temporaries) with headroom; clamp to v7x physical.
    itemsize = jnp.dtype(cdt).itemsize
    vmem_est = (
        2 * 2 * rows * C * itemsize                      # x + out blocks (x2 buf)
        + 2 * (C * 3 * H * D + H * D * C + C) * itemsize  # weights (x2 buf)
        + rows * 3 * H * D * itemsize                    # fused QKV scratch
        + H * rows * (D + 2) * 4                         # acc / m / l scratch
        + 3 * rows * tk * 4                              # score / p temporaries
        + rows * (H * D) * itemsize + rows * C * 4       # att / out temporaries
    )
    vmem_limit = int(min(max(2 * vmem_est + (4 << 20), 32 << 20), 64 << 20))

    return pl.pallas_call(
        kernel,
        out_shape=jax.ShapeDtypeStruct((B, T, C), cdt),
        grid_spec=pltpu.PrefetchScalarGridSpec(
            num_scalar_prefetch=0,
            grid=(B // Bt, n_kv),
            in_specs=[
                pl.BlockSpec((Bt, T, C), lambda b, k: (b, 0, 0)),   # x batch tile
                pl.BlockSpec((C, 3 * H * D), lambda b, k: (0, 0)),  # fused Wqkv
                pl.BlockSpec((H * D, C), lambda b, k: (0, 0)),      # proj weight
                pl.BlockSpec((1, C), lambda b, k: (0, 0)),          # proj bias
            ],
            out_specs=pl.BlockSpec((Bt, T, C), lambda b, k: (b, 0, 0)),
            scratch_shapes=[
                pltpu.VMEM((Bt, T, 3 * H * D), cdt),     # fused Q|K|V slab
                pltpu.VMEM((H, Bt, T, 1), jnp.float32),  # running row max m
                pltpu.VMEM((H, Bt, T, 1), jnp.float32),  # running row sum l
                pltpu.VMEM((H, Bt, T, D), jnp.float32),  # unnormalized output
            ],
        ),
        compiler_params=pltpu.CompilerParams(
            dimension_semantics=("parallel", "arbitrary"),
            vmem_limit_bytes=vmem_limit,
        ),
    )(x, wqkv, wproj, bproj)


def _reference(x, wq, wk, wv, w_proj, b_proj):
    """Plain-JAX reference mirroring the PyTorch forward (eval mode).

    Uses HIGHEST matmul precision so the reference itself is accurate f32."""
    B, T, C = x.shape
    H, _, D = wq.shape
    hp = jax.lax.Precision.HIGHEST
    q = jnp.einsum('btc,hcd->bhtd', x, wq, precision=hp)
    k = jnp.einsum('btc,hcd->bhtd', x, wk, precision=hp)
    v = jnp.einsum('btc,hcd->bhtd', x, wv, precision=hp)
    s = jnp.einsum('bhtd,bhsd->bhts', q, k, precision=hp) * (D ** -0.5)
    mask = jnp.tril(jnp.ones((T, T), dtype=bool))
    s = jnp.where(mask[None, None], s, -jnp.inf)
    p = jax.nn.softmax(s, axis=-1)
    out = jnp.einsum('bhts,bhsd->bthd', p, v, precision=hp).reshape(B, T, H * D)
    return jnp.matmul(out, w_proj, precision=hp) + b_proj[0]


if __name__ == "__main__":
    C, H, D = N_EMBED, N_HEADS, HEAD_SIZE

    key = jax.random.PRNGKey(0)
    kx1, kx2, kq, kk, kv_, kp, kb = jax.random.split(key, 7)

    # Deterministic synthetic parameters (shapes follow nn.Linear in __init__).
    wq = jax.random.normal(kq, (H, C, D), dtype=jnp.float32) * (C ** -0.5)
    wk = jax.random.normal(kk, (H, C, D), dtype=jnp.float32) * (C ** -0.5)
    wv = jax.random.normal(kv_, (H, C, D), dtype=jnp.float32) * (C ** -0.5)
    w_proj = jax.random.normal(kp, (H * D, C), dtype=jnp.float32) * ((H * D) ** -0.5)
    b_proj = jax.random.normal(kb, (1, C), dtype=jnp.float32) * 0.01

    # f32 tolerance note: the kernel's f32 matmuls run at DEFAULT TPU matmul
    # precision (bf16 MXU passes, ~2^-8 relative) and contract in a different
    # order than the HIGHEST-precision reference, so ~1e-2-level differences
    # are expected; the softmax itself is exact f32 (no approx reciprocal).
    F32_TOL = 2e-2

    # --- f32, short sequence (single KV block) ---
    B, T = 2, 8
    x = jax.random.normal(kx1, (B, T, C), dtype=jnp.float32)
    out = jax.block_until_ready(multi_head_attention(x, wq, wk, wv, w_proj, b_proj))
    ref = _reference(x, wq, wk, wv, w_proj, b_proj)
    assert out.shape == (B, T, C) and out.dtype == jnp.float32
    assert jnp.allclose(out, ref, atol=F32_TOL, rtol=F32_TOL), \
        float(jnp.max(jnp.abs(out - ref)))

    # --- f32, longer sequence exercising the KV-tiled online softmax ---
    B, T = 2, 256
    x = jax.random.normal(kx2, (B, T, C), dtype=jnp.float32)
    out = jax.block_until_ready(
        multi_head_attention(x, wq, wk, wv, w_proj, b_proj, block_kv=128))
    ref = _reference(x, wq, wk, wv, w_proj, b_proj)
    assert out.shape == (B, T, C)
    assert jnp.allclose(out, ref, atol=F32_TOL, rtol=F32_TOL), \
        float(jnp.max(jnp.abs(out - ref)))

    # --- bf16 path (bf16 MXU matmuls, f32 softmax / accumulation) ---
    bf16, f32 = jnp.bfloat16, jnp.float32
    out_bf = multi_head_attention(
        x.astype(bf16), wq.astype(bf16), wk.astype(bf16), wv.astype(bf16),
        w_proj.astype(bf16), b_proj.astype(bf16), block_kv=128)
    out_bf = jax.block_until_ready(out_bf)
    ref_bf = _reference(x.astype(bf16).astype(f32), wq.astype(bf16).astype(f32),
                        wk.astype(bf16).astype(f32), wv.astype(bf16).astype(f32),
                        w_proj.astype(bf16).astype(f32),
                        b_proj.astype(bf16).astype(f32))
    assert out_bf.shape == (B, T, C) and out_bf.dtype == bf16
    assert jnp.allclose(out_bf.astype(f32), ref_bf, atol=1e-1, rtol=1e-1), \
        float(jnp.max(jnp.abs(out_bf.astype(f32) - ref_bf)))

    print("KERNEL_OK")
</pallas_src>

<mosaic_0001>
module attributes {stable_mosaic.version = 11 : i64} {
  func.func @_mha_kernel(%arg0: i32, %arg1: i32, %arg2: memref<1x8x256xf32, #tpu.memory_space<vmem>>, %arg3: memref<256x768xf32, #tpu.memory_space<vmem>>, %arg4: memref<256x256xf32, #tpu.memory_space<vmem>>, %arg5: memref<1x256xf32, #tpu.memory_space<vmem>>, %arg6: memref<1x8x256xf32, #tpu.memory_space<vmem>>, %arg7: memref<1x8x768xf32, #tpu.memory_space<vmem>>, %arg8: memref<4x1x8x1xf32, #tpu.memory_space<vmem>>, %arg9: memref<4x1x8x1xf32, #tpu.memory_space<vmem>>, %arg10: memref<4x1x8x64xf32, #tpu.memory_space<vmem>>) attributes {dimension_semantics = [#tpu.dimension_semantics<parallel>, #tpu.dimension_semantics<arbitrary>], iteration_bounds = array<i64: 2, 1>, scalar_prefetch = 0 : i64, scratch_operands = 4 : i64, tpu.core_type = #tpu.core_type<tc>, window_params = [{transform_indices = @transform_0, window_bounds = array<i64: 1, 8, 256>}, {pipeline_mode = #tpu.pipeline_mode<synchronous>, transform_indices = @transform_1, window_bounds = array<i64: 256, 768>}, {pipeline_mode = #tpu.pipeline_mode<synchronous>, transform_indices = @transform_2, window_bounds = array<i64: 256, 256>}, {pipeline_mode = #tpu.pipeline_mode<synchronous>, transform_indices = @transform_3, window_bounds = array<i64: 1, 256>}, {transform_indices = @transform_4, window_bounds = array<i64: 1, 8, 256>}]} {
    %c0_i32 = arith.constant 0 : i32
    %0 = arith.cmpi eq, %arg1, %c0_i32 : i32
    %1 = arith.extui %0 : i1 to i32
    %c0_i32_0 = arith.constant 0 : i32
    %2 = arith.cmpi ne, %1, %c0_i32_0 : i32
    scf.if %2 {
      %c0_131 = arith.constant 0 : index
      %c0_132 = arith.constant 0 : index
      %c0_133 = arith.constant 0 : index
      %170 = vector.load %arg2[%c0_131, %c0_132, %c0_133] : memref<1x8x256xf32, #tpu.memory_space<vmem>>, vector<1x8x256xf32>
      %171 = vector.shape_cast %170 : vector<1x8x256xf32> to vector<8x256xf32>
      %c0_134 = arith.constant 0 : index
      %c0_135 = arith.constant 0 : index
      %172 = vector.load %arg3[%c0_134, %c0_135] : memref<256x768xf32, #tpu.memory_space<vmem>>, vector<256x768xf32>
      %cst_136 = arith.constant dense<0.000000e+00> : vector<8x768xf32>
      %173 = tpu.matmul %171, %172, %cst_136 {dimension_numbers = #tpu.dot_dimension_numbers<[1], [0], [0], [1], [0, 0, 1, 1], [], []>} : vector<8x256xf32>, vector<256x768xf32>, vector<8x768xf32> -> vector<8x768xf32>
      %174 = vector.shape_cast %173 : vector<8x768xf32> to vector<1x8x768xf32>
      %c0_137 = arith.constant 0 : index
      %c0_138 = arith.constant 0 : index
      %c0_139 = arith.constant 0 : index
      %175 = vector.load %arg7[%c0_137, %c0_138, %c0_139] : memref<1x8x768xf32, #tpu.memory_space<vmem>>, vector<1x8x768xf32>
      tpu.vector_store %arg7[%c0_137, %c0_138, %c0_139], %174 {strides = array<i32>} : memref<1x8x768xf32, #tpu.memory_space<vmem>>, vector<1x8x768xf32>,
      %cst_140 = arith.constant -1.000000e+30 : f32
      %176 = vector.broadcast %cst_140 : f32 to vector<4x1x8x1xf32>
      %c0_141 = arith.constant 0 : index
      %c0_142 = arith.constant 0 : index
      %c0_143 = arith.constant 0 : index
      %c0_144 = arith.constant 0 : index
      %177 = vector.load %arg8[%c0_141, %c0_142, %c0_143, %c0_144] : memref<4x1x8x1xf32, #tpu.memory_space<vmem>>, vector<4x1x8x1xf32>
      tpu.vector_store %arg8[%c0_141, %c0_142, %c0_143, %c0_144], %176 {strides = array<i32>} : memref<4x1x8x1xf32, #tpu.memory_space<vmem>>, vector<4x1x8x1xf32>,
      %cst_145 = arith.constant 0.000000e+00 : f32
      %178 = vector.broadcast %cst_145 : f32 to vector<4x1x8x1xf32>
      %c0_146 = arith.constant 0 : index
      %c0_147 = arith.constant 0 : index
      %c0_148 = arith.constant 0 : index
      %c0_149 = arith.constant 0 : index
      %179 = vector.load %arg9[%c0_146, %c0_147, %c0_148, %c0_149] : memref<4x1x8x1xf32, #tpu.memory_space<vmem>>, vector<4x1x8x1xf32>
      tpu.vector_store %arg9[%c0_146, %c0_147, %c0_148, %c0_149], %178 {strides = array<i32>} : memref<4x1x8x1xf32, #tpu.memory_space<vmem>>, vector<4x1x8x1xf32>,
      %cst_150 = arith.constant 0.000000e+00 : f32
      %180 = vector.broadcast %cst_150 : f32 to vector<4x1x8x64xf32>
      %c0_151 = arith.constant 0 : index
      %c0_152 = arith.constant 0 : index
      %c0_153 = arith.constant 0 : index
      %c0_154 = arith.constant 0 : index
      %181 = vector.load %arg10[%c0_151, %c0_152, %c0_153, %c0_154] : memref<4x1x8x64xf32, #tpu.memory_space<vmem>>, vector<4x1x8x64xf32>
      tpu.vector_store %arg10[%c0_151, %c0_152, %c0_153, %c0_154], %180 {strides = array<i32>} : memref<4x1x8x64xf32, #tpu.memory_space<vmem>>, vector<4x1x8x64xf32>,
    } else {
    }
    %c8_i32 = arith.constant 8 : i32
    %3 = arith.muli %arg1, %c8_i32 : i32
    %4 = tpu.assume_multiple %3, 8 : i32
    %5 = tpu.iota {dimensions = array<i32: 0>} : vector<8x8xi32>
    %6 = tpu.iota {dimensions = array<i32: 1>} : vector<8x8xi32>
    %7 = vector.broadcast %4 : i32 to vector<8x8xi32>
    %8 = arith.addi %6, %7 : vector<8x8xi32>
    %9 = arith.cmpi sge, %5, %8 : vector<8x8xi32>
    %10 = vector.shape_cast %9 : vector<8x8xi1> to vector<1x8x8xi1>
    %c0 = arith.constant 0 : index
    %c0_1 = arith.constant 0 : index
    %c0_2 = arith.constant 0 : index
    %11 = vector.load %arg7[%c0, %c0_1, %c0_2] : memref<1x8x768xf32, #tpu.memory_space<vmem>>, vector<1x8x64xf32>
    %c0_3 = arith.constant 0 : index
    %12 = arith.index_cast %4 : i32 to index
    %c256 = arith.constant 256 : index
    %13 = vector.load %arg7[%c0_3, %12, %c256] : memref<1x8x768xf32, #tpu.memory_space<vmem>>, vector<1x8x64xf32>
    %c0_4 = arith.constant 0 : index
    %14 = arith.index_cast %4 : i32 to index
    %c512 = arith.constant 512 : index
    %15 = vector.load %arg7[%c0_4, %14, %c512] : memref<1x8x768xf32, #tpu.memory_space<vmem>>, vector<1x8x64xf32>
    "tpu.trace_start"() <{level = 10 : i32, message = "bqd,bkd->bqk"}> : () -> ()
    %cst = arith.constant dense<0.000000e+00> : vector<1x8x8xf32>
    %16 = tpu.matmul %11, %13, %cst {dimension_numbers = #tpu.dot_dimension_numbers<[2], [2], [1], [1], [0, 0, 0, 1, 1, 1], [0], [0]>} : vector<1x8x64xf32>, vector<1x8x64xf32>, vector<1x8x8xf32> -> vector<1x8x8xf32>
    %cst_5 = arith.constant -1.000000e+30 : f32
    "tpu.trace_stop"() : () -> ()
    %17 = vector.broadcast %cst_5 : f32 to vector<1x8x8xf32>
    %18 = arith.select %10, %16, %17 : vector<1x8x8xi1>, vector<1x8x8xf32>
    %c0_6 = arith.constant 0 : index
    %c0_7 = arith.constant 0 : index
    %c0_8 = arith.constant 0 : index
    %c0_9 = arith.constant 0 : index
    %19 = vector.load %arg8[%c0_6, %c0_7, %c0_8, %c0_9] : memref<4x1x8x1xf32, #tpu.memory_space<vmem>>, vector<1x1x8x1xf32>
    %20 = vector.shape_cast %19 : vector<1x1x8x1xf32> to vector<1x8x1xf32>
    %cst_10 = arith.constant dense<0xFF800000> : vector<1x8xf32>
    %21 = vector.multi_reduction <maximumf>, %18, %cst_10 [2] : vector<1x8x8xf32> to vector<1x8xf32>
    %22 = vector.shape_cast %21 : vector<1x8xf32> to vector<1x8x1xf32>
    %23 = arith.maximumf %20, %22 : vector<1x8x1xf32>
    %24 = arith.subf %20, %23 : vector<1x8x1xf32>
    %25 = math.exp %24 : vector<1x8x1xf32>
    %26 = vector.broadcast %23 : vector<1x8x1xf32> to vector<1x8x8xf32>
    %27 = arith.subf %18, %26 : vector<1x8x8xf32>
    %28 = math.exp %27 : vector<1x8x8xf32>
    %c0_11 = arith.constant 0 : index
    %c0_12 = arith.constant 0 : index
    %c0_13 = arith.constant 0 : index
    %c0_14 = arith.constant 0 : index
    %29 = vector.load %arg9[%c0_11, %c0_12, %c0_13, %c0_14] : memref<4x1x8x1xf32, #tpu.memory_space<vmem>>, vector<1x1x8x1xf32>
    %30 = vector.shape_cast %29 : vector<1x1x8x1xf32> to vector<1x8x1xf32>
    %31 = arith.mulf %25, %30 : vector<1x8x1xf32>
    %cst_15 = arith.constant dense<0.000000e+00> : vector<1x8xf32>
    %32 = vector.multi_reduction <add>, %28, %cst_15 [2] : vector<1x8x8xf32> to vector<1x8xf32>
    %33 = vector.shape_cast %32 : vector<1x8xf32> to vector<1x8x1xf32>
    %34 = arith.addf %31, %33 : vector<1x8x1xf32>
    %c0_16 = arith.constant 0 : index
    %c0_17 = arith.constant 0 : index
    %c0_18 = arith.constant 0 : index
    %c0_19 = arith.constant 0 : index
    %35 = vector.load %arg9[%c0_16, %c0_17, %c0_18, %c0_19] : memref<4x1x8x1xf32, #tpu.memory_space<vmem>>, vector<1x1x8x1xf32>
    %36 = vector.shape_cast %35 : vector<1x1x8x1xf32> to vector<1x8x1xf32>
    %37 = vector.shape_cast %34 : vector<1x8x1xf32> to vector<1x1x8x1xf32>
    tpu.vector_store %arg9[%c0_16, %c0_17, %c0_18, %c0_19], %37 {strides = array<i32>} : memref<4x1x8x1xf32, #tpu.memory_space<vmem>>, vector<1x1x8x1xf32>,
    %c0_20 = arith.constant 0 : index
    %c0_21 = arith.constant 0 : index
    %c0_22 = arith.constant 0 : index
    %c0_23 = arith.constant 0 : index
    %38 = vector.load %arg10[%c0_20, %c0_21, %c0_22, %c0_23] : memref<4x1x8x64xf32, #tpu.memory_space<vmem>>, vector<1x1x8x64xf32>
    %39 = vector.shape_cast %38 : vector<1x1x8x64xf32> to vector<1x8x64xf32>
    %40 = vector.broadcast %25 : vector<1x8x1xf32> to vector<1x8x64xf32>
    %41 = arith.mulf %40, %39 : vector<1x8x64xf32>
    "tpu.trace_start"() <{level = 10 : i32, message = "bqk,bkd->bqd"}> : () -> ()
    %cst_24 = arith.constant dense<0.000000e+00> : vector<1x8x64xf32>
    %42 = tpu.matmul %28, %15, %cst_24 {dimension_numbers = #tpu.dot_dimension_numbers<[2], [1], [1], [2], [0, 0, 0, 1, 1, 2], [0], [0]>} : vector<1x8x8xf32>, vector<1x8x64xf32>, vector<1x8x64xf32> -> vector<1x8x64xf32>
    "tpu.trace_stop"() : () -> ()
    %43 = arith.addf %41, %42 : vector<1x8x64xf32>
    %c0_25 = arith.constant 0 : index
    %c0_26 = arith.constant 0 : index
    %c0_27 = arith.constant 0 : index
    %c0_28 = arith.constant 0 : index
    %44 = vector.load %arg10[%c0_25, %c0_26, %c0_27, %c0_28] : memref<4x1x8x64xf32, #tpu.memory_space<vmem>>, vector<1x1x8x64xf32>
    %45 = vector.shape_cast %44 : vector<1x1x8x64xf32> to vector<1x8x64xf32>
    %46 = vector.shape_cast %43 : vector<1x8x64xf32> to vector<1x1x8x64xf32>
    tpu.vector_store %arg10[%c0_25, %c0_26, %c0_27, %c0_28], %46 {strides = array<i32>} : memref<4x1x8x64xf32, #tpu.memory_space<vmem>>, vector<1x1x8x64xf32>,
    %c0_29 = arith.constant 0 : index
    %c0_30 = arith.constant 0 : index
    %c0_31 = arith.constant 0 : index
    %c0_32 = arith.constant 0 : index
    %47 = vector.load %arg8[%c0_29, %c0_30, %c0_31, %c0_32] : memref<4x1x8x1xf32, #tpu.memory_space<vmem>>, vector<1x1x8x1xf32>
    %48 = vector.shape_cast %47 : vector<1x1x8x1xf32> to vector<1x8x1xf32>
    %49 = vector.shape_cast %23 : vector<1x8x1xf32> to vector<1x1x8x1xf32>
    tpu.vector_store %arg8[%c0_29, %c0_30, %c0_31, %c0_32], %49 {strides = array<i32>} : memref<4x1x8x1xf32, #tpu.memory_space<vmem>>, vector<1x1x8x1xf32>,
    %c0_33 = arith.constant 0 : index
    %c0_34 = arith.constant 0 : index
    %c64 = arith.constant 64 : index
    %50 = vector.load %arg7[%c0_33, %c0_34, %c64] : memref<1x8x768xf32, #tpu.memory_space<vmem>>, vector<1x8x64xf32>
    %c0_35 = arith.constant 0 : index
    %51 = arith.index_cast %4 : i32 to index
    %c320 = arith.constant 320 : index
    %52 = vector.load %arg7[%c0_35, %51, %c320] : memref<1x8x768xf32, #tpu.memory_space<vmem>>, vector<1x8x64xf32>
    %c0_36 = arith.constant 0 : index
    %53 = arith.index_cast %4 : i32 to index
    %c576 = arith.constant 576 : index
    %54 = vector.load %arg7[%c0_36, %53, %c576] : memref<1x8x768xf32, #tpu.memory_space<vmem>>, vector<1x8x64xf32>
    "tpu.trace_start"() <{level = 10 : i32, message = "bqd,bkd->bqk"}> : () -> ()
    %cst_37 = arith.constant dense<0.000000e+00> : vector<1x8x8xf32>
    %55 = tpu.matmul %50, %52, %cst_37 {dimension_numbers = #tpu.dot_dimension_numbers<[2], [2], [1], [1], [0, 0, 0, 1, 1, 1], [0], [0]>} : vector<1x8x64xf32>, vector<1x8x64xf32>, vector<1x8x8xf32> -> vector<1x8x8xf32>
    %cst_38 = arith.constant -1.000000e+30 : f32
    "tpu.trace_stop"() : () -> ()
    %56 = vector.broadcast %cst_38 : f32 to vector<1x8x8xf32>
    %57 = arith.select %10, %55, %56 : vector<1x8x8xi1>, vector<1x8x8xf32>
    %c1 = arith.constant 1 : index
    %c0_39 = arith.constant 0 : index
    %c0_40 = arith.constant 0 : index
    %c0_41 = arith.constant 0 : index
    %58 = vector.load %arg8[%c1, %c0_39, %c0_40, %c0_41] : memref<4x1x8x1xf32, #tpu.memory_space<vmem>>, vector<1x1x8x1xf32>
    %59 = vector.shape_cast %58 : vector<1x1x8x1xf32> to vector<1x8x1xf32>
    %cst_42 = arith.constant dense<0xFF800000> : vector<1x8xf32>
    %60 = vector.multi_reduction <maximumf>, %57, %cst_42 [2] : vector<1x8x8xf32> to vector<1x8xf32>
    %61 = vector.shape_cast %60 : vector<1x8xf32> to vector<1x8x1xf32>
    %62 = arith.maximumf %59, %61 : vector<1x8x1xf32>
    %63 = arith.subf %59, %62 : vector<1x8x1xf32>
    %64 = math.exp %63 : vector<1x8x1xf32>
    %65 = vector.broadcast %62 : vector<1x8x1xf32> to vector<1x8x8xf32>
    %66 = arith.subf %57, %65 : vector<1x8x8xf32>
    %67 = math.exp %66 : vector<1x8x8xf32>
    %c1_43 = arith.constant 1 : index
    %c0_44 = arith.constant 0 : index
    %c0_45 = arith.constant 0 : index
    %c0_46 = arith.constant 0 : index
    %68 = vector.load %arg9[%c1_43, %c0_44, %c0_45, %c0_46] : memref<4x1x8x1xf32, #tpu.memory_space<vmem>>, vector<1x1x8x1xf32>
    %69 = vector.shape_cast %68 : vector<1x1x8x1xf32> to vector<1x8x1xf32>
    %70 = arith.mulf %64, %69 : vector<1x8x1xf32>
    %cst_47 = arith.constant dense<0.000000e+00> : vector<1x8xf32>
    %71 = vector.multi_reduction <add>, %67, %cst_47 [2] : vector<1x8x8xf32> to vector<1x8xf32>
    %72 = vector.shape_cast %71 : vector<1x8xf32> to vector<1x8x1xf32>
    %73 = arith.addf %70, %72 : vector<1x8x1xf32>
    %c1_48 = arith.constant 1 : index
    %c0_49 = arith.constant 0 : index
    %c0_50 = arith.constant 0 : index
    %c0_51 = arith.constant 0 : index
    %74 = vector.load %arg9[%c1_48, %c0_49, %c0_50, %c0_51] : memref<4x1x8x1xf32, #tpu.memory_space<vmem>>, vector<1x1x8x1xf32>
    %75 = vector.shape_cast %74 : vector<1x1x8x1xf32> to vector<1x8x1xf32>
    %76 = vector.shape_cast %73 : vector<1x8x1xf32> to vector<1x1x8x1xf32>
    tpu.vector_store %arg9[%c1_48, %c0_49, %c0_50, %c0_51], %76 {strides = array<i32>} : memref<4x1x8x1xf32, #tpu.memory_space<vmem>>, vector<1x1x8x1xf32>,
    %c1_52 = arith.constant 1 : index
    %c0_53 = arith.constant 0 : index
    %c0_54 = arith.constant 0 : index
    %c0_55 = arith.constant 0 : index
    %77 = vector.load %arg10[%c1_52, %c0_53, %c0_54, %c0_55] : memref<4x1x8x64xf32, #tpu.memory_space<vmem>>, vector<1x1x8x64xf32>
    %78 = vector.shape_cast %77 : vector<1x1x8x64xf32> to vector<1x8x64xf32>
    %79 = vector.broadcast %64 : vector<1x8x1xf32> to vector<1x8x64xf32>
    %80 = arith.mulf %79, %78 : vector<1x8x64xf32>
    "tpu.trace_start"() <{level = 10 : i32, message = "bqk,bkd->bqd"}> : () -> ()
    %cst_56 = arith.constant dense<0.000000e+00> : vector<1x8x64xf32>
    %81 = tpu.matmul %67, %54, %cst_56 {dimension_numbers = #tpu.dot_dimension_numbers<[2], [1], [1], [2], [0, 0, 0, 1, 1, 2], [0], [0]>} : vector<1x8x8xf32>, vector<1x8x64xf32>, vector<1x8x64xf32> -> vector<1x8x64xf32>
    "tpu.trace_stop"() : () -> ()
    %82 = arith.addf %80, %81 : vector<1x8x64xf32>
    %c1_57 = arith.constant 1 : index
    %c0_58 = arith.constant 0 : index
    %c0_59 = arith.constant 0 : index
    %c0_60 = arith.constant 0 : index
    %83 = vector.load %arg10[%c1_57, %c0_58, %c0_59, %c0_60] : memref<4x1x8x64xf32, #tpu.memory_space<vmem>>, vector<1x1x8x64xf32>
    %84 = vector.shape_cast %83 : vector<1x1x8x64xf32> to vector<1x8x64xf32>
    %85 = vector.shape_cast %82 : vector<1x8x64xf32> to vector<1x1x8x64xf32>
    tpu.vector_store %arg10[%c1_57, %c0_58, %c0_59, %c0_60], %85 {strides = array<i32>} : memref<4x1x8x64xf32, #tpu.memory_space<vmem>>, vector<1x1x8x64xf32>,
    %c1_61 = arith.constant 1 : index
    %c0_62 = arith.constant 0 : index
    %c0_63 = arith.constant 0 : index
    %c0_64 = arith.constant 0 : index
    %86 = vector.load %arg8[%c1_61, %c0_62, %c0_63, %c0_64] : memref<4x1x8x1xf32, #tpu.memory_space<vmem>>, vector<1x1x8x1xf32>
    %87 = vector.shape_cast %86 : vector<1x1x8x1xf32> to vector<1x8x1xf32>
    %88 = vector.shape_cast %62 : vector<1x8x1xf32> to vector<1x1x8x1xf32>
    tpu.vector_store %arg8[%c1_61, %c0_62, %c0_63, %c0_64], %88 {strides = array<i32>} : memref<4x1x8x1xf32, #tpu.memory_space<vmem>>, vector<1x1x8x1xf32>,
    %c0_65 = arith.constant 0 : index
    %c0_66 = arith.constant 0 : index
    %c128 = arith.constant 128 : index
    %89 = vector.load %arg7[%c0_65, %c0_66, %c128] : memref<1x8x768xf32, #tpu.memory_space<vmem>>, vector<1x8x64xf32>
    %c0_67 = arith.constant 0 : index
    %90 = arith.index_cast %4 : i32 to index
    %c384 = arith.constant 384 : index
    %91 = vector.load %arg7[%c0_67, %90, %c384] : memref<1x8x768xf32, #tpu.memory_space<vmem>>, vector<1x8x64xf32>
    %c0_68 = arith.constant 0 : index
    %92 = arith.index_cast %4 : i32 to index
    %c640 = arith.constant 640 : index
    %93 = vector.load %arg7[%c0_68, %92, %c640] : memref<1x8x768xf32, #tpu.memory_space<vmem>>, vector<1x8x64xf32>
    "tpu.trace_start"() <{level = 10 : i32, message = "bqd,bkd->bqk"}> : () -> ()
    %cst_69 = arith.constant dense<0.000000e+00> : vector<1x8x8xf32>
    %94 = tpu.matmul %89, %91, %cst_69 {dimension_numbers = #tpu.dot_dimension_numbers<[2], [2], [1], [1], [0, 0, 0, 1, 1, 1], [0], [0]>} : vector<1x8x64xf32>, vector<1x8x64xf32>, vector<1x8x8xf32> -> vector<1x8x8xf32>
    %cst_70 = arith.constant -1.000000e+30 : f32
    "tpu.trace_stop"() : () -> ()
    %95 = vector.broadcast %cst_70 : f32 to vector<1x8x8xf32>
    %96 = arith.select %10, %94, %95 : vector<1x8x8xi1>, vector<1x8x8xf32>
    %c2 = arith.constant 2 : index
    %c0_71 = arith.constant 0 : index
    %c0_72 = arith.constant 0 : index
    %c0_73 = arith.constant 0 : index
    %97 = vector.load %arg8[%c2, %c0_71, %c0_72, %c0_73] : memref<4x1x8x1xf32, #tpu.memory_space<vmem>>, vector<1x1x8x1xf32>
    %98 = vector.shape_cast %97 : vector<1x1x8x1xf32> to vector<1x8x1xf32>
    %cst_74 = arith.constant dense<0xFF800000> : vector<1x8xf32>
    %99 = vector.multi_reduction <maximumf>, %96, %cst_74 [2] : vector<1x8x8xf32> to vector<1x8xf32>
    %100 = vector.shape_cast %99 : vector<1x8xf32> to vector<1x8x1xf32>
    %101 = arith.maximumf %98, %100 : vector<1x8x1xf32>
    %102 = arith.subf %98, %101 : vector<1x8x1xf32>
    %103 = math.exp %102 : vector<1x8x1xf32>
    %104 = vector.broadcast %101 : vector<1x8x1xf32> to vector<1x8x8xf32>
    %105 = arith.subf %96, %104 : vector<1x8x8xf32>
    %106 = math.exp %105 : vector<1x8x8xf32>
    %c2_75 = arith.constant 2 : index
    %c0_76 = arith.constant 0 : index
    %c0_77 = arith.constant 0 : index
    %c0_78 = arith.constant 0 : index
    %107 = vector.load %arg9[%c2_75, %c0_76, %c0_77, %c0_78] : memref<4x1x8x1xf32, #tpu.memory_space<vmem>>, vector<1x1x8x1xf32>
    %108 = vector.shape_cast %107 : vector<1x1x8x1xf32> to vector<1x8x1xf32>
    %109 = arith.mulf %103, %108 : vector<1x8x1xf32>
    %cst_79 = arith.constant dense<0.000000e+00> : vector<1x8xf32>
    %110 = vector.multi_reduction <add>, %106, %cst_79 [2] : vector<1x8x8xf32> to vector<1x8xf32>
    %111 = vector.shape_cast %110 : vector<1x8xf32> to vector<1x8x1xf32>
    %112 = arith.addf %109, %111 : vector<1x8x1xf32>
    %c2_80 = arith.constant 2 : index
    %c0_81 = arith.constant 0 : index
    %c0_82 = arith.constant 0 : index
    %c0_83 = arith.constant 0 : index
    %113 = vector.load %arg9[%c2_80, %c0_81, %c0_82, %c0_83] : memref<4x1x8x1xf32, #tpu.memory_space<vmem>>, vector<1x1x8x1xf32>
    %114 = vector.shape_cast %113 : vector<1x1x8x1xf32> to vector<1x8x1xf32>
    %115 = vector.shape_cast %112 : vector<1x8x1xf32> to vector<1x1x8x1xf32>
    tpu.vector_store %arg9[%c2_80, %c0_81, %c0_82, %c0_83], %115 {strides = array<i32>} : memref<4x1x8x1xf32, #tpu.memory_space<vmem>>, vector<1x1x8x1xf32>,
    %c2_84 = arith.constant 2 : index
    %c0_85 = arith.constant 0 : index
    %c0_86 = arith.constant 0 : index
    %c0_87 = arith.constant 0 : index
    %116 = vector.load %arg10[%c2_84, %c0_85, %c0_86, %c0_87] : memref<4x1x8x64xf32, #tpu.memory_space<vmem>>, vector<1x1x8x64xf32>
    %117 = vector.shape_cast %116 : vector<1x1x8x64xf32> to vector<1x8x64xf32>
    %118 = vector.broadcast %103 : vector<1x8x1xf32> to vector<1x8x64xf32>
    %119 = arith.mulf %118, %117 : vector<1x8x64xf32>
    "tpu.trace_start"() <{level = 10 : i32, message = "bqk,bkd->bqd"}> : () -> ()
    %cst_88 = arith.constant dense<0.000000e+00> : vector<1x8x64xf32>
    %120 = tpu.matmul %106, %93, %cst_88 {dimension_numbers = #tpu.dot_dimension_numbers<[2], [1], [1], [2], [0, 0, 0, 1, 1, 2], [0], [0]>} : vector<1x8x8xf32>, vector<1x8x64xf32>, vector<1x8x64xf32> -> vector<1x8x64xf32>
    "tpu.trace_stop"() : () -> ()
    %121 = arith.addf %119, %120 : vector<1x8x64xf32>
    %c2_89 = arith.constant 2 : index
    %c0_90 = arith.constant 0 : index
    %c0_91 = arith.constant 0 : index
    %c0_92 = arith.constant 0 : index
    %122 = vector.load %arg10[%c2_89, %c0_90, %c0_91, %c0_92] : memref<4x1x8x64xf32, #tpu.memory_space<vmem>>, vector<1x1x8x64xf32>
    %123 = vector.shape_cast %122 : vector<1x1x8x64xf32> to vector<1x8x64xf32>
    %124 = vector.shape_cast %121 : vector<1x8x64xf32> to vector<1x1x8x64xf32>
    tpu.vector_store %arg10[%c2_89, %c0_90, %c0_91, %c0_92], %124 {strides = array<i32>} : memref<4x1x8x64xf32, #tpu.memory_space<vmem>>, vector<1x1x8x64xf32>,
    %c2_93 = arith.constant 2 : index
    %c0_94 = arith.constant 0 : index
    %c0_95 = arith.constant 0 : index
    %c0_96 = arith.constant 0 : index
    %125 = vector.load %arg8[%c2_93, %c0_94, %c0_95, %c0_96] : memref<4x1x8x1xf32, #tpu.memory_space<vmem>>, vector<1x1x8x1xf32>
    %126 = vector.shape_cast %125 : vector<1x1x8x1xf32> to vector<1x8x1xf32>
    %127 = vector.shape_cast %101 : vector<1x8x1xf32> to vector<1x1x8x1xf32>
    tpu.vector_store %arg8[%c2_93, %c0_94, %c0_95, %c0_96], %127 {strides = array<i32>} : memref<4x1x8x1xf32, #tpu.memory_space<vmem>>, vector<1x1x8x1xf32>,
    %c0_97 = arith.constant 0 : index
    %c0_98 = arith.constant 0 : index
    %c192 = arith.constant 192 : index
    %128 = vector.load %arg7[%c0_97, %c0_98, %c192] : memref<1x8x768xf32, #tpu.memory_space<vmem>>, vector<1x8x64xf32>
    %c0_99 = arith.constant 0 : index
    %129 = arith.index_cast %4 : i32 to index
    %c448 = arith.constant 448 : index
    %130 = vector.load %arg7[%c0_99, %129, %c448] : memref<1x8x768xf32, #tpu.memory_space<vmem>>, vector<1x8x64xf32>
    %c0_100 = arith.constant 0 : index
    %131 = arith.index_cast %4 : i32 to index
    %c704 = arith.constant 704 : index
    %132 = vector.load %arg7[%c0_100, %131, %c704] : memref<1x8x768xf32, #tpu.memory_space<vmem>>, vector<1x8x64xf32>
    "tpu.trace_start"() <{level = 10 : i32, message = "bqd,bkd->bqk"}> : () -> ()
    %cst_101 = arith.constant dense<0.000000e+00> : vector<1x8x8xf32>
    %133 = tpu.matmul %128, %130, %cst_101 {dimension_numbers = #tpu.dot_dimension_numbers<[2], [2], [1], [1], [0, 0, 0, 1, 1, 1], [0], [0]>} : vector<1x8x64xf32>, vector<1x8x64xf32>, vector<1x8x8xf32> -> vector<1x8x8xf32>
    %cst_102 = arith.constant -1.000000e+30 : f32
    "tpu.trace_stop"() : () -> ()
    %134 = vector.broadcast %cst_102 : f32 to vector<1x8x8xf32>
    %135 = arith.select %10, %133, %134 : vector<1x8x8xi1>, vector<1x8x8xf32>
    %c3 = arith.constant 3 : index
    %c0_103 = arith.constant 0 : index
    %c0_104 = arith.constant 0 : index
    %c0_105 = arith.constant 0 : index
    %136 = vector.load %arg8[%c3, %c0_103, %c0_104, %c0_105] : memref<4x1x8x1xf32, #tpu.memory_space<vmem>>, vector<1x1x8x1xf32>
    %137 = vector.shape_cast %136 : vector<1x1x8x1xf32> to vector<1x8x1xf32>
    %cst_106 = arith.constant dense<0xFF800000> : vector<1x8xf32>
    %138 = vector.multi_reduction <maximumf>, %135, %cst_106 [2] : vector<1x8x8xf32> to vector<1x8xf32>
    %139 = vector.shape_cast %138 : vector<1x8xf32> to vector<1x8x1xf32>
    %140 = arith.maximumf %137, %139 : vector<1x8x1xf32>
    %141 = arith.subf %137, %140 : vector<1x8x1xf32>
    %142 = math.exp %141 : vector<1x8x1xf32>
    %143 = vector.broadcast %140 : vector<1x8x1xf32> to vector<1x8x8xf32>
    %144 = arith.subf %135, %143 : vector<1x8x8xf32>
    %145 = math.exp %144 : vector<1x8x8xf32>
    %c3_107 = arith.constant 3 : index
    %c0_108 = arith.constant 0 : index
    %c0_109 = arith.constant 0 : index
    %c0_110 = arith.constant 0 : index
    %146 = vector.load %arg9[%c3_107, %c0_108, %c0_109, %c0_110] : memref<4x1x8x1xf32, #tpu.memory_space<vmem>>, vector<1x1x8x1xf32>
    %147 = vector.shape_cast %146 : vector<1x1x8x1xf32> to vector<1x8x1xf32>
    %148 = arith.mulf %142, %147 : vector<1x8x1xf32>
    %cst_111 = arith.constant dense<0.000000e+00> : vector<1x8xf32>
    %149 = vector.multi_reduction <add>, %145, %cst_111 [2] : vector<1x8x8xf32> to vector<1x8xf32>
    %150 = vector.shape_cast %149 : vector<1x8xf32> to vector<1x8x1xf32>
    %151 = arith.addf %148, %150 : vector<1x8x1xf32>
    %c3_112 = arith.constant 3 : index
    %c0_113 = arith.constant 0 : index
    %c0_114 = arith.constant 0 : index
    %c0_115 = arith.constant 0 : index
    %152 = vector.load %arg9[%c3_112, %c0_113, %c0_114, %c0_115] : memref<4x1x8x1xf32, #tpu.memory_space<vmem>>, vector<1x1x8x1xf32>
    %153 = vector.shape_cast %152 : vector<1x1x8x1xf32> to vector<1x8x1xf32>
    %154 = vector.shape_cast %151 : vector<1x8x1xf32> to vector<1x1x8x1xf32>
    tpu.vector_store %arg9[%c3_112, %c0_113, %c0_114, %c0_115], %154 {strides = array<i32>} : memref<4x1x8x1xf32, #tpu.memory_space<vmem>>, vector<1x1x8x1xf32>,
    %c3_116 = arith.constant 3 : index
    %c0_117 = arith.constant 0 : index
    %c0_118 = arith.constant 0 : index
    %c0_119 = arith.constant 0 : index
    %155 = vector.load %arg10[%c3_116, %c0_117, %c0_118, %c0_119] : memref<4x1x8x64xf32, #tpu.memory_space<vmem>>, vector<1x1x8x64xf32>
    %156 = vector.shape_cast %155 : vector<1x1x8x64xf32> to vector<1x8x64xf32>
    %157 = vector.broadcast %142 : vector<1x8x1xf32> to vector<1x8x64xf32>
    %158 = arith.mulf %157, %156 : vector<1x8x64xf32>
    "tpu.trace_start"() <{level = 10 : i32, message = "bqk,bkd->bqd"}> : () -> ()
    %cst_120 = arith.constant dense<0.000000e+00> : vector<1x8x64xf32>
    %159 = tpu.matmul %145, %132, %cst_120 {dimension_numbers = #tpu.dot_dimension_numbers<[2], [1], [1], [2], [0, 0, 0, 1, 1, 2], [0], [0]>} : vector<1x8x8xf32>, vector<1x8x64xf32>, vector<1x8x64xf32> -> vector<1x8x64xf32>
    "tpu.trace_stop"() : () -> ()
    %160 = arith.addf %158, %159 : vector<1x8x64xf32>
    %c3_121 = arith.constant 3 : index
    %c0_122 = arith.constant 0 : index
    %c0_123 = arith.constant 0 : index
    %c0_124 = arith.constant 0 : index
    %161 = vector.load %arg10[%c3_121, %c0_122, %c0_123, %c0_124] : memref<4x1x8x64xf32, #tpu.memory_space<vmem>>, vector<1x1x8x64xf32>
    %162 = vector.shape_cast %161 : vector<1x1x8x64xf32> to vector<1x8x64xf32>
    %163 = vector.shape_cast %160 : vector<1x8x64xf32> to vector<1x1x8x64xf32>
    tpu.vector_store %arg10[%c3_121, %c0_122, %c0_123, %c0_124], %163 {strides = array<i32>} : memref<4x1x8x64xf32, #tpu.memory_space<vmem>>, vector<1x1x8x64xf32>,
    %c3_125 = arith.constant 3 : index
    %c0_126 = arith.constant 0 : index
    %c0_127 = arith.constant 0 : index
    %c0_128 = arith.constant 0 : index
    %164 = vector.load %arg8[%c3_125, %c0_126, %c0_127, %c0_128] : memref<4x1x8x1xf32, #tpu.memory_space<vmem>>, vector<1x1x8x1xf32>
    %165 = vector.shape_cast %164 : vector<1x1x8x1xf32> to vector<1x8x1xf32>
    %166 = vector.shape_cast %140 : vector<1x8x1xf32> to vector<1x1x8x1xf32>
    tpu.vector_store %arg8[%c3_125, %c0_126, %c0_127, %c0_128], %166 {strides = array<i32>} : memref<4x1x8x1xf32, #tpu.memory_space<vmem>>, vector<1x1x8x1xf32>,
    %c0_i32_129 = arith.constant 0 : i32
    %167 = arith.cmpi eq, %arg1, %c0_i32_129 : i32
    %168 = arith.extui %167 : i1 to i32
    %c0_i32_130 = arith.constant 0 : i32
    %169 = arith.cmpi ne, %168, %c0_i32_130 : i32
    scf.if %169 {
      %c0_131 = arith.constant 0 : index
      %c0_132 = arith.constant 0 : index
      %c0_133 = arith.constant 0 : index
      %c0_134 = arith.constant 0 : index
      %170 = vector.load %arg9[%c0_131, %c0_132, %c0_133, %c0_134] : memref<4x1x8x1xf32, #tpu.memory_space<vmem>>, vector<1x1x8x1xf32>
      %171 = vector.shape_cast %170 : vector<1x1x8x1xf32> to vector<1x8x1xf32>
      %172 = tpu.reciprocal %171 : vector<1x8x1xf32> -> vector<1x8x1xf32>
      %c0_135 = arith.constant 0 : index
      %c0_136 = arith.constant 0 : index
      %c0_137 = arith.constant 0 : index
      %c0_138 = arith.constant 0 : index
      %173 = vector.load %arg10[%c0_135, %c0_136, %c0_137, %c0_138] : memref<4x1x8x64xf32, #tpu.memory_space<vmem>>, vector<1x1x8x64xf32>
      %174 = vector.shape_cast %173 : vector<1x1x8x64xf32> to vector<1x8x64xf32>
      %175 = vector.broadcast %172 : vector<1x8x1xf32> to vector<1x8x64xf32>
      %176 = arith.mulf %174, %175 : vector<1x8x64xf32>
      %177 = vector.shape_cast %176 : vector<1x8x64xf32> to vector<8x64xf32>
      %c1_139 = arith.constant 1 : index
      %c0_140 = arith.constant 0 : index
      %c0_141 = arith.constant 0 : index
      %c0_142 = arith.constant 0 : index
      %178 = vector.load %arg9[%c1_139, %c0_140, %c0_141, %c0_142] : memref<4x1x8x1xf32, #tpu.memory_space<vmem>>, vector<1x1x8x1xf32>
      %179 = vector.shape_cast %178 : vector<1x1x8x1xf32> to vector<1x8x1xf32>
      %180 = tpu.reciprocal %179 : vector<1x8x1xf32> -> vector<1x8x1xf32>
      %c1_143 = arith.constant 1 : index
      %c0_144 = arith.constant 0 : index
      %c0_145 = arith.constant 0 : index
      %c0_146 = arith.constant 0 : index
      %181 = vector.load %arg10[%c1_143, %c0_144, %c0_145, %c0_146] : memref<4x1x8x64xf32, #tpu.memory_space<vmem>>, vector<1x1x8x64xf32>
      %182 = vector.shape_cast %181 : vector<1x1x8x64xf32> to vector<1x8x64xf32>
      %183 = vector.broadcast %180 : vector<1x8x1xf32> to vector<1x8x64xf32>
      %184 = arith.mulf %182, %183 : vector<1x8x64xf32>
      %185 = vector.shape_cast %184 : vector<1x8x64xf32> to vector<8x64xf32>
      %c2_147 = arith.constant 2 : index
      %c0_148 = arith.constant 0 : index
      %c0_149 = arith.constant 0 : index
      %c0_150 = arith.constant 0 : index
      %186 = vector.load %arg9[%c2_147, %c0_148, %c0_149, %c0_150] : memref<4x1x8x1xf32, #tpu.memory_space<vmem>>, vector<1x1x8x1xf32>
      %187 = vector.shape_cast %186 : vector<1x1x8x1xf32> to vector<1x8x1xf32>
      %188 = tpu.reciprocal %187 : vector<1x8x1xf32> -> vector<1x8x1xf32>
      %c2_151 = arith.constant 2 : index
      %c0_152 = arith.constant 0 : index
      %c0_153 = arith.constant 0 : index
      %c0_154 = arith.constant 0 : index
      %189 = vector.load %arg10[%c2_151, %c0_152, %c0_153, %c0_154] : memref<4x1x8x64xf32, #tpu.memory_space<vmem>>, vector<1x1x8x64xf32>
      %190 = vector.shape_cast %189 : vector<1x1x8x64xf32> to vector<1x8x64xf32>
      %191 = vector.broadcast %188 : vector<1x8x1xf32> to vector<1x8x64xf32>
      %192 = arith.mulf %190, %191 : vector<1x8x64xf32>
      %193 = vector.shape_cast %192 : vector<1x8x64xf32> to vector<8x64xf32>
      %c3_155 = arith.constant 3 : index
      %c0_156 = arith.constant 0 : index
      %c0_157 = arith.constant 0 : index
      %c0_158 = arith.constant 0 : index
      %194 = vector.load %arg9[%c3_155, %c0_156, %c0_157, %c0_158] : memref<4x1x8x1xf32, #tpu.memory_space<vmem>>, vector<1x1x8x1xf32>
      %195 = vector.shape_cast %194 : vector<1x1x8x1xf32> to vector<1x8x1xf32>
      %196 = tpu.reciprocal %195 : vector<1x8x1xf32> -> vector<1x8x1xf32>
      %c3_159 = arith.constant 3 : index
      %c0_160 = arith.constant 0 : index
      %c0_161 = arith.constant 0 : index
      %c0_162 = arith.constant 0 : index
      %197 = vector.load %arg10[%c3_159, %c0_160, %c0_161, %c0_162] : memref<4x1x8x64xf32, #tpu.memory_space<vmem>>, vector<1x1x8x64xf32>
      %198 = vector.shape_cast %197 : vector<1x1x8x64xf32> to vector<1x8x64xf32>
      %199 = vector.broadcast %196 : vector<1x8x1xf32> to vector<1x8x64xf32>
      %200 = arith.mulf %198, %199 : vector<1x8x64xf32>
      %201 = vector.shape_cast %200 : vector<1x8x64xf32> to vector<8x64xf32>
      %202 = tpu.concatenate %177, %185, %193, %201 in 1 : vector<8x64xf32>, vector<8x64xf32>, vector<8x64xf32>, vector<8x64xf32> -> vector<8x256xf32>
      %c0_163 = arith.constant 0 : index
      %c0_164 = arith.constant 0 : index
      %203 = vector.load %arg4[%c0_163, %c0_164] : memref<256x256xf32, #tpu.memory_space<vmem>>, vector<256x256xf32>
      %cst_165 = arith.constant dense<0.000000e+00> : vector<8x256xf32>
      %204 = tpu.matmul %202, %203, %cst_165 {dimension_numbers = #tpu.dot_dimension_numbers<[1], [0], [0], [1], [0, 0, 1, 1], [], []>} : vector<8x256xf32>, vector<256x256xf32>, vector<8x256xf32> -> vector<8x256xf32>
      %c0_166 = arith.constant 0 : index
      %c0_167 = arith.constant 0 : index
      %205 = vector.load %arg5[%c0_166, %c0_167] : memref<1x256xf32, #tpu.memory_space<vmem>>, vector<1x256xf32>
      %206 = vector.broadcast %205 : vector<1x256xf32> to vector<8x256xf32>
      %207 = arith.addf %204, %206 : vector<8x256xf32>
      %208 = vector.shape_cast %207 : vector<8x256xf32> to vector<1x8x256xf32>
      %c0_168 = arith.constant 0 : index
      %c0_169 = arith.constant 0 : index
      %c0_170 = arith.constant 0 : index
      %209 = vector.load %arg6[%c0_168, %c0_169, %c0_170] : memref<1x8x256xf32, #tpu.memory_space<vmem>>, vector<1x8x256xf32>
      tpu.vector_store %arg6[%c0_168, %c0_169, %c0_170], %208 {strides = array<i32>} : memref<1x8x256xf32, #tpu.memory_space<vmem>>, vector<1x8x256xf32>,
    } else {
    }
    return
  }
  func.func @transform_0(%arg0: i32, %arg1: i32) -> (i32, i32, i32) {
    %c0_i32 = arith.constant 0 : i32
    %c0_i32_0 = arith.constant 0 : i32
    %c0_i32_1 = arith.constant 0 : i32
    return %arg0, %c0_i32, %c0_i32_0 : i32, i32, i32
  }
  func.func @transform_1(%arg0: i32, %arg1: i32) -> (i32, i32) {
    %c0_i32 = arith.constant 0 : i32
    %c0_i32_0 = arith.constant 0 : i32
    %c0_i32_1 = arith.constant 0 : i32
    return %c0_i32, %c0_i32_0 : i32, i32
  }
  func.func @transform_2(%arg0: i32, %arg1: i32) -> (i32, i32) {
    %c0_i32 = arith.constant 0 : i32
    %c0_i32_0 = arith.constant 0 : i32
    %c0_i32_1 = arith.constant 0 : i32
    return %c0_i32, %c0_i32_0 : i32, i32
  }
  func.func @transform_3(%arg0: i32, %arg1: i32) -> (i32, i32) {
    %c0_i32 = arith.constant 0 : i32
    %c0_i32_0 = arith.constant 0 : i32
    %c0_i32_1 = arith.constant 0 : i32
    return %c0_i32, %c0_i32_0 : i32, i32
  }
  func.func @transform_4(%arg0: i32, %arg1: i32) -> (i32, i32, i32) {
    %c0_i32 = arith.constant 0 : i32
    %c0_i32_0 = arith.constant 0 : i32
    %c0_i32_1 = arith.constant 0 : i32
    return %arg0, %c0_i32, %c0_i32_0 : i32, i32, i32
  }
}

</mosaic_0001>

<llo_original>
// kernel: multi_head_attention.1
$region0: #{multi_head_attention.1}
  #allocation0 [shape = 'u32[]', space=smem, size = 0x4, offset = 0x4, fixed_abs, tag = 'smem constant byte address 0x4 - core index']
  #allocation1 [shape = 'u32[144,128]{1,0:T(1,128)}', space=vmem, size = 0x12000, scoped, tag = 'internal scratch']
  #allocation2 [shape = 'f32[1,8,768]{2,1,0:T(8,128)}', space=vmem, size = 0x6000, scoped, tag = 'scratch operand']
  #allocation3 [shape = 'f32[4,1,8,1]{3,2,1,0:T(8,128)}', space=vmem, size = 0x4000, scoped, tag = 'scratch operand']
  #allocation4 [shape = 'f32[4,1,8,1]{3,2,1,0:T(8,128)}', space=vmem, size = 0x4000, scoped, tag = 'scratch operand']
  #allocation5 [shape = 'f32[4,1,8,64]{3,2,1,0:T(8,128)}', space=vmem, size = 0x4000, scoped, tag = 'scratch operand']
  %s0 = inlined_call_operand.vmem [shape: f32[2,8,256], index: 0, kind: input, shape index: {}]
  %s1 = inlined_call_operand.vmem [shape: f32[256,768], index: 1, kind: input, shape index: {}]
  %s2 = inlined_call_operand.vmem [shape: f32[256,256], index: 2, kind: input, shape index: {}]
  %s3 = inlined_call_operand.vmem [shape: f32[1,256], index: 3, kind: input, shape index: {}]
  %s4 = inlined_call_operand.hbm [shape: f32[2,8,256], index: 4, kind: output, shape index: {}]
  %s5 = sld [smem:[#allocation0]]
  $region57: #{multi_head_attention.1} parent=0
    _
  %s7 = ssub.s32 1, %s5
  %s8 = scalar_select 0, %s7, %s5
  $region1: #{multi_head_attention.1} parent=0
    #allocation6 [shape = 'u8[16384]{0}', space=vmem, size = 0x4000, scoped, tag = 'output window, operand 0']
    #allocation7 [shape = 's32[2]{0}', space=sflag, size = 0x8, scoped, tag = 'scoped memory for multi_head_attention.1']
    %9 = vsyncpa [#allocation7], 0
    %s10 = scalar_lea.sflag [#allocation7], 1
    %11 = vsyncpa %s10, 0
    loop: start=0, step=1, limit=4
    $region2: #{multi_head_attention.1} parent=1 // loop_pre_header
      _
    $region3: #{multi_head_attention.1} parent=1 // loop_header
      %s13 = sphi 0, %s17
      %p14 = scmp.ge.s32.totalorder %s13, 4
      %s20 = sphi 0, %s32
      %s21 = sphi 0, %s28
      %s22 = sphi 0, %s20
      %s23 = sphi 0, %s21
      %s24 = sphi 0, %s22
      %s25 = sphi 0, %s23
      %s35 = sphi 0, %s37
      %s38 = sphi 0, %s35
      %s39 = sphi 0, %s38
      %s55 = sphi 0, %s39
      %s59 = sphi 0, %s59
      %s61 = sphi 0, %s59
      %s62 = sphi 0, %s61
      %s76 = sphi 0, %s62
      %s80 = sphi 0, %s80
      %s82 = sphi 0, %s80
      %s83 = sphi 0, %s82
      %s97 = sphi 0, %s83
      %s101 = sphi 0, %s101
      %s103 = sphi 0, %s101
      %s104 = sphi 0, %s103
      %s118 = sphi 0, %s104
      %s124 = sphi 0, %s126
      %s127 = sphi 0, %s124
      %s128 = sphi 0, %s127
      %s144 = sphi 0, %s128
    $region4: #{multi_head_attention.1} parent=1 // loop_header_branch
      %16 = sbr.rel (%p14) target = $region8
    $region5: #{multi_head_attention.1} parent=1 // loop_body
      %s18 = ssub.s32 %s13, 1
      %s19 = ssub.s32 %s13, 2
      %s26 = sadd.s32 1, %s21
      %p27 = scmp.ge.s32.totalorder %s26, 1
      %s28 = scalar_select %p27, 0, %s26
      %s29 = sadd.s32 1, %s20
      %s30 = scalar_select %p27, %s29, %s20
      %p31 = scmp.ge.s32.totalorder %s30, 2
      %s32 = scalar_select %p31, 0, %s30
      %s33 = ssub.s32 %s20, %s32
      %p34 = scmp.eq.s32.totalorder %s33, 0
      %s36 = sadd.s32 %s35, 1
      %s37 = scalar_select %p34, %s35, %s36
      %p40 = pneg %p34
      %p41 = scmp.eq.s32.totalorder %s13, 1
      %p42 = por %p40, %p41
      %p43 = scmp.ne.s32.totalorder %s35, %s38
      %p44 = scmp.eq.s32.totalorder %s13, 0
      %p45 = por %p43, %p44
      %p46 = scmp.ne.s32.totalorder %s35, %s38
      %p47 = scmp.eq.s32.totalorder %s18, 1
      %p48 = por %p46, %p47
      %p49 = scmp.ne.s32.totalorder %s38, %s39
      %p50 = scmp.eq.s32.totalorder %s18, 0
      %p51 = por %p49, %p50
      %p52 = scmp.ne.s32.totalorder %s38, %s39
      %p53 = scmp.eq.s32.totalorder %s19, 1
      %p54 = por %p52, %p53
      %p56 = scmp.ne.s32.totalorder %s39, %s55
      %p57 = scmp.eq.s32.totalorder %s19, 0
      %p58 = por %p56, %p57
      %s60 = sadd.s32 %s59, 1
      %p63 = scmp.eq.s32.totalorder %s13, 1
      %p64 = scmp.ne.s32.totalorder %s59, %s61
      %p65 = scmp.eq.s32.totalorder %s13, 0
      %p66 = por %p64, %p65
      %p67 = scmp.ne.s32.totalorder %s59, %s61
      %p68 = scmp.eq.s32.totalorder %s18, 1
      %p69 = por %p67, %p68
      %p70 = scmp.ne.s32.totalorder %s61, %s62
      %p71 = scmp.eq.s32.totalorder %s18, 0
      %p72 = por %p70, %p71
      %p73 = scmp.ne.s32.totalorder %s61, %s62
      %p74 = scmp.eq.s32.totalorder %s19, 1
      %p75 = por %p73, %p74
      %p77 = scmp.ne.s32.totalorder %s62, %s76
      %p78 = scmp.eq.s32.totalorder %s19, 0
      %p79 = por %p77, %p78
      %s81 = sadd.s32 %s80, 1
      %p84 = scmp.eq.s32.totalorder %s13, 1
      %p85 = scmp.ne.s32.totalorder %s80, %s82
      %p86 = scmp.eq.s32.totalorder %s13, 0
      %p87 = por %p85, %p86
      %p88 = scmp.ne.s32.totalorder %s80, %s82
      %p89 = scmp.eq.s32.totalorder %s18, 1
      %p90 = por %p88, %p89
      %p91 = scmp.ne.s32.totalorder %s82, %s83
      %p92 = scmp.eq.s32.totalorder %s18, 0
      %p93 = por %p91, %p92
      %p94 = scmp.ne.s32.totalorder %s82, %s83
      %p95 = scmp.eq.s32.totalorder %s19, 1
      %p96 = por %p94, %p95
      %p98 = scmp.ne.s32.totalorder %s83, %s97
      %p99 = scmp.eq.s32.totalorder %s19, 0
      %p100 = por %p98, %p99
      %s102 = sadd.s32 %s101, 1
      %p105 = scmp.eq.s32.totalorder %s13, 1
      %p106 = scmp.ne.s32.totalorder %s101, %s103
      %p107 = scmp.eq.s32.totalorder %s13, 0
      %p108 = por %p106, %p107
      %p109 = scmp.ne.s32.totalorder %s101, %s103
      %p110 = scmp.eq.s32.totalorder %s18, 1
      %p111 = por %p109, %p110
      %p112 = scmp.ne.s32.totalorder %s103, %s104
      %p113 = scmp.eq.s32.totalorder %s18, 0
      %p114 = por %p112, %p113
      %p115 = scmp.ne.s32.totalorder %s103, %s104
      %p116 = scmp.eq.s32.totalorder %s19, 1
      %p117 = por %p115, %p116
      %p119 = scmp.ne.s32.totalorder %s104, %s118
      %p120 = scmp.eq.s32.totalorder %s19, 0
      %p121 = por %p119, %p120
      %s122 = ssub.s32 %s20, %s32
      %p123 = scmp.eq.s32.totalorder %s122, 0
      %s125 = sadd.s32 %s124, 1
      %s126 = scalar_select %p123, %s124, %s125
      %p129 = pneg %p123
      %p130 = scmp.eq.s32.totalorder %s13, 1
      %p131 = por %p129, %p130
      %p132 = scmp.ne.s32.totalorder %s124, %s127
      %p133 = scmp.eq.s32.totalorder %s13, 0
      %p134 = por %p132, %p133
      %p135 = scmp.ne.s32.totalorder %s124, %s127
      %p136 = scmp.eq.s32.totalorder %s18, 1
      %p137 = por %p135, %p136
      %p138 = scmp.ne.s32.totalorder %s127, %s128
      %p139 = scmp.eq.s32.totalorder %s18, 0
      %p140 = por %p138, %p139
      %p141 = scmp.ne.s32.totalorder %s127, %s128
      %p142 = scmp.eq.s32.totalorder %s19, 1
      %p143 = por %p141, %p142
      %p145 = scmp.ne.s32.totalorder %s128, %s144
      %p146 = scmp.eq.s32.totalorder %s19, 0
      %p147 = por %p145, %p146
      %p148 = scmp.le.s32.totalorder 1, %s13
      %p149 = scmp.lt.s32.totalorder %s13, 3
      %p150 = pnand %p148, %p149
      %p151 = pneg %p150
      // Predicated region
      $region9: #{multi_head_attention.1} parent=5 // pred_check
        _
      $region10: #{multi_head_attention.1} parent=5 // pred_check_branch
        %153 = sbr.rel (%p150) target = $region12
      $region11: #{multi_head_attention.1} parent=5 // pred_region
        %s154 = ssub.s32 %s13, 1
        // Predicated region
        $region13: #{multi_head_attention.1} parent=11 // pred_check
          %p155 = pneg %p72
        $region14: #{multi_head_attention.1} parent=11 // pred_check_branch
          %157 = sbr.rel (%p155) target = $region16
        $region15: #{multi_head_attention.1} parent=11 // pred_region
          _
        $region16: #{multi_head_attention.1} parent=11 // pred_fallthru
          _
        // Predicated region
        $region17: #{multi_head_attention.1} parent=11 // pred_check
          %p158 = pneg %p93
        $region18: #{multi_head_attention.1} parent=11 // pred_check_branch
          %160 = sbr.rel (%p158) target = $region20
        $region19: #{multi_head_attention.1} parent=11 // pred_region
          _
        $region20: #{multi_head_attention.1} parent=11 // pred_fallthru
          _
        // Predicated region
        $region21: #{multi_head_attention.1} parent=11 // pred_check
          %p161 = pneg %p114
        $region22: #{multi_head_attention.1} parent=11 // pred_check_branch
          %163 = sbr.rel (%p161) target = $region24
        $region23: #{multi_head_attention.1} parent=11 // pred_region
          _
        $region24: #{multi_head_attention.1} parent=11 // pred_fallthru
          _
      $region12: #{multi_head_attention.1} parent=5 // pred_fallthru
        _
      %p164 = scmp.lt.s32.totalorder %s13, 2
      // Predicated region
      $region25: #{multi_head_attention.1} parent=5 // pred_check
        %p165 = pneg %p164
      $region26: #{multi_head_attention.1} parent=5 // pred_check_branch
        %167 = sbr.rel (%p165) target = $region28
      $region27: #{multi_head_attention.1} parent=5 // pred_region
        // Predicated region
        $region29: #{multi_head_attention.1} parent=27 // pred_check
          %p168 = pneg %p45
        $region30: #{multi_head_attention.1} parent=27 // pred_check_branch
          %170 = sbr.rel (%p168) target = $region32
        $region31: #{multi_head_attention.1} parent=27 // pred_region
          %p171 = scmp.lt.s32.totalorder %s20, 1
          %s172 = scalar_select %p171, %s20, 1
          %s173 = smul.addr %s172, 2
          %s174 = smul.addr %s173, 8
          %s175 = scalar_lea.vmem %s0, %s174
        $region32: #{multi_head_attention.1} parent=27 // pred_fallthru
          _
      $region28: #{multi_head_attention.1} parent=5 // pred_fallthru
        _
      %p176 = scmp.le.s32.totalorder 1, %s13
      %p177 = scmp.lt.s32.totalorder %s13, 3
      %p178 = pnand %p176, %p177
      %p179 = pneg %p178
      // Predicated region
      $region33: #{multi_head_attention.1} parent=5 // pred_check
        _
      $region34: #{multi_head_attention.1} parent=5 // pred_check_branch
        %181 = sbr.rel (%p178) target = $region36
      $region35: #{multi_head_attention.1} parent=5 // pred_region
        %s182 = ssub.s32 %s13, 1
        %p183 = scmp.lt.s32.totalorder %s22, 1
        %s184 = scalar_select %p183, %s22, 1
        %s185 = smul.addr %s184, 2
        %s186 = smul.addr %s185, 8
        %s187 = scalar_lea.vmem %s0, %s186
        %p188 = pneg %p51
        %p189 = pneg %p48
        %p190 = pneg %p72
        %p191 = pneg %p69
        %p192 = pneg %p93
        %p193 = pneg %p90
        %p194 = pneg %p114
        %p195 = pneg %p111
        %p196 = pneg %p140
        %p197 = pneg %p137
        %s198 = sand.u32 %s127, 1
        %s199 = scalar_lea.sflag [#allocation7], %s198
        %s200 = sand.u32 %s127, 1
        %s201 = smul.addr %s200, 16
        %s202 = scalar_lea.vmem [#allocation6], %s201
        %p203 = scmp.lt.s32.totalorder %s22, 1
        %s204 = scalar_select %p203, %s22, 1
        %s205 = smul.addr %s204, 2
        %s206 = smul.addr %s205, 8
        %s207 = scalar_lea.vmem %s0, %s206
        %p208 = scmp.eq.s32.totalorder %s23, 0
        // Predicated region
        $region37: #{multi_head_attention.1} parent=35 // pred_check
          %p209 = pneg %p208
        $region38: #{multi_head_attention.1} parent=35 // pred_check_branch
          %211 = sbr.rel (%p209) target = $region40
        $region39: #{multi_head_attention.1} parent=35 // pred_region
          %v212 = vld [vmem:[%s207] sm:$0xff]
          %v213 = vld [vmem:[%s207 + $0x8] sm:$0xff]
          %v214 = vld [vmem:[%s1] sm:$0xff]
          %v215 = vld [vmem:[%s1 + $0x8] sm:$0xff]
          %v216 = vld [vmem:[%s1 + $0x10] sm:$0xff]
          %v217 = vld [vmem:[%s1 + $0x18] sm:$0xff]
          %v218 = vld [vmem:[%s1 + $0x20] sm:$0xff]
          %v219 = vld [vmem:[%s1 + $0x28] sm:$0xff]
          %v220 = vld [vmem:[%s1 + $0x30] sm:$0xff]
          %v221 = vld [vmem:[%s1 + $0x38] sm:$0xff]
          %v222 = vld [vmem:[%s1 + $0x40] sm:$0xff]
          %v223 = vld [vmem:[%s1 + $0x48] sm:$0xff]
          %v224 = vld [vmem:[%s1 + $0x50] sm:$0xff]
          %v225 = vld [vmem:[%s1 + $0x58] sm:$0xff]
          %v226 = vld [vmem:[%s1 + $0x60] sm:$0xff]
          %v227 = vld [vmem:[%s1 + $0x68] sm:$0xff]
          %v228 = vld [vmem:[%s1 + $0x70] sm:$0xff]
          %v229 = vld [vmem:[%s1 + $0x78] sm:$0xff]
          %v230 = vld [vmem:[%s1 + $0x80] sm:$0xff]
          %v231 = vld [vmem:[%s1 + $0x88] sm:$0xff]
          %v232 = vld [vmem:[%s1 + $0x90] sm:$0xff]
          %v233 = vld [vmem:[%s1 + $0x98] sm:$0xff]
          %v234 = vld [vmem:[%s1 + $0xa0] sm:$0xff]
          %v235 = vld [vmem:[%s1 + $0xa8] sm:$0xff]
          %v236 = vld [vmem:[%s1 + $0xb0] sm:$0xff]
          %v237 = vld [vmem:[%s1 + $0xb8] sm:$0xff]
          %v238 = vld [vmem:[%s1 + $0xc0] sm:$0xff]
          %v239 = vld [vmem:[%s1 + $0xc8] sm:$0xff]
          %v240 = vld [vmem:[%s1 + $0xd0] sm:$0xff]
          %v241 = vld [vmem:[%s1 + $0xd8] sm:$0xff]
          %v242 = vld [vmem:[%s1 + $0xe0] sm:$0xff]
          %v243 = vld [vmem:[%s1 + $0xe8] sm:$0xff]
          %v244 = vld [vmem:[%s1 + $0xf0] sm:$0xff]
          %v245 = vld [vmem:[%s1 + $0xf8] sm:$0xff]
          %v246 = vld [vmem:[%s1 + $0x100] sm:$0xff]
          %v247 = vld [vmem:[%s1 + $0x108] sm:$0xff]
          %v248 = vld [vmem:[%s1 + $0x110] sm:$0xff]
          %v249 = vld [vmem:[%s1 + $0x118] sm:$0xff]
          %v250 = vld [vmem:[%s1 + $0x120] sm:$0xff]
          %v251 = vld [vmem:[%s1 + $0x128] sm:$0xff]
          %v252 = vld [vmem:[%s1 + $0x130] sm:$0xff]
          %v253 = vld [vmem:[%s1 + $0x138] sm:$0xff]
          %v254 = vld [vmem:[%s1 + $0x140] sm:$0xff]
          %v255 = vld [vmem:[%s1 + $0x148] sm:$0xff]
          %v256 = vld [vmem:[%s1 + $0x150] sm:$0xff]
          %v257 = vld [vmem:[%s1 + $0x158] sm:$0xff]
          %v258 = vld [vmem:[%s1 + $0x160] sm:$0xff]
          %v259 = vld [vmem:[%s1 + $0x168] sm:$0xff]
          %v260 = vld [vmem:[%s1 + $0x170] sm:$0xff]
          %v261 = vld [vmem:[%s1 + $0x178] sm:$0xff]
          %v262 = vld [vmem:[%s1 + $0x180] sm:$0xff]
          %v263 = vld [vmem:[%s1 + $0x188] sm:$0xff]
          %v264 = vld [vmem:[%s1 + $0x190] sm:$0xff]
          %v265 = vld [vmem:[%s1 + $0x198] sm:$0xff]
          %v266 = vld [vmem:[%s1 + $0x1a0] sm:$0xff]
          %v267 = vld [vmem:[%s1 + $0x1a8] sm:$0xff]
          %v268 = vld [vmem:[%s1 + $0x1b0] sm:$0xff]
          %v269 = vld [vmem:[%s1 + $0x1b8] sm:$0xff]
          %v270 = vld [vmem:[%s1 + $0x1c0] sm:$0xff]
          %v271 = vld [vmem:[%s1 + $0x1c8] sm:$0xff]
          %v272 = vld [vmem:[%s1 + $0x1d0] sm:$0xff]
          %v273 = vld [vmem:[%s1 + $0x1d8] sm:$0xff]
          %v274 = vld [vmem:[%s1 + $0x1e0] sm:$0xff]
          %v275 = vld [vmem:[%s1 + $0x1e8] sm:$0xff]
          %v276 = vld [vmem:[%s1 + $0x1f0] sm:$0xff]
          %v277 = vld [vmem:[%s1 + $0x1f8] sm:$0xff]
          %v278 = vld [vmem:[%s1 + $0x200] sm:$0xff]
          %v279 = vld [vmem:[%s1 + $0x208] sm:$0xff]
          %v280 = vld [vmem:[%s1 + $0x210] sm:$0xff]
          %v281 = vld [vmem:[%s1 + $0x218] sm:$0xff]
          %v282 = vld [vmem:[%s1 + $0x220] sm:$0xff]
          %v283 = vld [vmem:[%s1 + $0x228] sm:$0xff]
          %v284 = vld [vmem:[%s1 + $0x230] sm:$0xff]
          %v285 = vld [vmem:[%s1 + $0x238] sm:$0xff]
          %v286 = vld [vmem:[%s1 + $0x240] sm:$0xff]
          %v287 = vld [vmem:[%s1 + $0x248] sm:$0xff]
          %v288 = vld [vmem:[%s1 + $0x250] sm:$0xff]
          %v289 = vld [vmem:[%s1 + $0x258] sm:$0xff]
          %v290 = vld [vmem:[%s1 + $0x260] sm:$0xff]
          %v291 = vld [vmem:[%s1 + $0x268] sm:$0xff]
          %v292 = vld [vmem:[%s1 + $0x270] sm:$0xff]
          %v293 = vld [vmem:[%s1 + $0x278] sm:$0xff]
          %v294 = vld [vmem:[%s1 + $0x280] sm:$0xff]
          %v295 = vld [vmem:[%s1 + $0x288] sm:$0xff]
          %v296 = vld [vmem:[%s1 + $0x290] sm:$0xff]
          %v297 = vld [vmem:[%s1 + $0x298] sm:$0xff]
          %v298 = vld [vmem:[%s1 + $0x2a0] sm:$0xff]
          %v299 = vld [vmem:[%s1 + $0x2a8] sm:$0xff]
          %v300 = vld [vmem:[%s1 + $0x2b0] sm:$0xff]
          %v301 = vld [vmem:[%s1 + $0x2b8] sm:$0xff]
          %v302 = vld [vmem:[%s1 + $0x2c0] sm:$0xff]
          %v303 = vld [vmem:[%s1 + $0x2c8] sm:$0xff]
          %v304 = vld [vmem:[%s1 + $0x2d0] sm:$0xff]
          %v305 = vld [vmem:[%s1 + $0x2d8] sm:$0xff]
          %v306 = vld [vmem:[%s1 + $0x2e0] sm:$0xff]
          %v307 = vld [vmem:[%s1 + $0x2e8] sm:$0xff]
          %v308 = vld [vmem:[%s1 + $0x2f0] sm:$0xff]
          %v309 = vld [vmem:[%s1 + $0x2f8] sm:$0xff]
          %v310 = vld [vmem:[%s1 + $0x300] sm:$0xff]
          %v311 = vld [vmem:[%s1 + $0x308] sm:$0xff]
          %v312 = vld [vmem:[%s1 + $0x310] sm:$0xff]
          %v313 = vld [vmem:[%s1 + $0x318] sm:$0xff]
          %v314 = vld [vmem:[%s1 + $0x320] sm:$0xff]
          %v315 = vld [vmem:[%s1 + $0x328] sm:$0xff]
          %v316 = vld [vmem:[%s1 + $0x330] sm:$0xff]
          %v317 = vld [vmem:[%s1 + $0x338] sm:$0xff]
          %v318 = vld [vmem:[%s1 + $0x340] sm:$0xff]
          %v319 = vld [vmem:[%s1 + $0x348] sm:$0xff]
          %v320 = vld [vmem:[%s1 + $0x350] sm:$0xff]
          %v321 = vld [vmem:[%s1 + $0x358] sm:$0xff]
          %v322 = vld [vmem:[%s1 + $0x360] sm:$0xff]
          %v323 = vld [vmem:[%s1 + $0x368] sm:$0xff]
          %v324 = vld [vmem:[%s1 + $0x370] sm:$0xff]
          %v325 = vld [vmem:[%s1 + $0x378] sm:$0xff]
          %v326 = vld [vmem:[%s1 + $0x380] sm:$0xff]
          %v327 = vld [vmem:[%s1 + $0x388] sm:$0xff]
          %v328 = vld [vmem:[%s1 + $0x390] sm:$0xff]
          %v329 = vld [vmem:[%s1 + $0x398] sm:$0xff]
          %v330 = vld [vmem:[%s1 + $0x3a0] sm:$0xff]
          %v331 = vld [vmem:[%s1 + $0x3a8] sm:$0xff]
          %v332 = vld [vmem:[%s1 + $0x3b0] sm:$0xff]
          %v333 = vld [vmem:[%s1 + $0x3b8] sm:$0xff]
          %v334 = vld [vmem:[%s1 + $0x3c0] sm:$0xff]
          %v335 = vld [vmem:[%s1 + $0x3c8] sm:$0xff]
          %v336 = vld [vmem:[%s1 + $0x3d0] sm:$0xff]
          %v337 = vld [vmem:[%s1 + $0x3d8] sm:$0xff]
          %v338 = vld [vmem:[%s1 + $0x3e0] sm:$0xff]
          %v339 = vld [vmem:[%s1 + $0x3e8] sm:$0xff]
          %v340 = vld [vmem:[%s1 + $0x3f0] sm:$0xff]
          %v341 = vld [vmem:[%s1 + $0x3f8] sm:$0xff]
          %v342 = vld [vmem:[%s1 + $0x400] sm:$0xff]
          %v343 = vld [vmem:[%s1 + $0x408] sm:$0xff]
          %v344 = vld [vmem:[%s1 + $0x410] sm:$0xff]
          %v345 = vld [vmem:[%s1 + $0x418] sm:$0xff]
          %v346 = vld [vmem:[%s1 + $0x420] sm:$0xff]
          %v347 = vld [vmem:[%s1 + $0x428] sm:$0xff]
          %v348 = vld [vmem:[%s1 + $0x430] sm:$0xff]
          %v349 = vld [vmem:[%s1 + $0x438] sm:$0xff]
          %v350 = vld [vmem:[%s1 + $0x440] sm:$0xff]
          %v351 = vld [vmem:[%s1 + $0x448] sm:$0xff]
          %v352 = vld [vmem:[%s1 + $0x450] sm:$0xff]
          %v353 = vld [vmem:[%s1 + $0x458] sm:$0xff]
          %v354 = vld [vmem:[%s1 + $0x460] sm:$0xff]
          %v355 = vld [vmem:[%s1 + $0x468] sm:$0xff]
          %v356 = vld [vmem:[%s1 + $0x470] sm:$0xff]
          %v357 = vld [vmem:[%s1 + $0x478] sm:$0xff]
          %v358 = vld [vmem:[%s1 + $0x480] sm:$0xff]
          %v359 = vld [vmem:[%s1 + $0x488] sm:$0xff]
          %v360 = vld [vmem:[%s1 + $0x490] sm:$0xff]
          %v361 = vld [vmem:[%s1 + $0x498] sm:$0xff]
          %v362 = vld [vmem:[%s1 + $0x4a0] sm:$0xff]
          %v363 = vld [vmem:[%s1 + $0x4a8] sm:$0xff]
          %v364 = vld [vmem:[%s1 + $0x4b0] sm:$0xff]
          %v365 = vld [vmem:[%s1 + $0x4b8] sm:$0xff]
          %v366 = vld [vmem:[%s1 + $0x4c0] sm:$0xff]
          %v367 = vld [vmem:[%s1 + $0x4c8] sm:$0xff]
          %v368 = vld [vmem:[%s1 + $0x4d0] sm:$0xff]
          %v369 = vld [vmem:[%s1 + $0x4d8] sm:$0xff]
          %v370 = vld [vmem:[%s1 + $0x4e0] sm:$0xff]
          %v371 = vld [vmem:[%s1 + $0x4e8] sm:$0xff]
          %v372 = vld [vmem:[%s1 + $0x4f0] sm:$0xff]
          %v373 = vld [vmem:[%s1 + $0x4f8] sm:$0xff]
          %v374 = vld [vmem:[%s1 + $0x500] sm:$0xff]
          %v375 = vld [vmem:[%s1 + $0x508] sm:$0xff]
          %v376 = vld [vmem:[%s1 + $0x510] sm:$0xff]
          %v377 = vld [vmem:[%s1 + $0x518] sm:$0xff]
          %v378 = vld [vmem:[%s1 + $0x520] sm:$0xff]
          %v379 = vld [vmem:[%s1 + $0x528] sm:$0xff]
          %v380 = vld [vmem:[%s1 + $0x530] sm:$0xff]
          %v381 = vld [vmem:[%s1 + $0x538] sm:$0xff]
          %v382 = vld [vmem:[%s1 + $0x540] sm:$0xff]
          %v383 = vld [vmem:[%s1 + $0x548] sm:$0xff]
          %v384 = vld [vmem:[%s1 + $0x550] sm:$0xff]
          %v385 = vld [vmem:[%s1 + $0x558] sm:$0xff]
          %v386 = vld [vmem:[%s1 + $0x560] sm:$0xff]
          %v387 = vld [vmem:[%s1 + $0x568] sm:$0xff]
          %v388 = vld [vmem:[%s1 + $0x570] sm:$0xff]
          %v389 = vld [vmem:[%s1 + $0x578] sm:$0xff]
          %v390 = vld [vmem:[%s1 + $0x580] sm:$0xff]
          %v391 = vld [vmem:[%s1 + $0x588] sm:$0xff]
          %v392 = vld [vmem:[%s1 + $0x590] sm:$0xff]
          %v393 = vld [vmem:[%s1 + $0x598] sm:$0xff]
          %v394 = vld [vmem:[%s1 + $0x5a0] sm:$0xff]
          %v395 = vld [vmem:[%s1 + $0x5a8] sm:$0xff]
          %v396 = vld [vmem:[%s1 + $0x5b0] sm:$0xff]
          %v397 = vld [vmem:[%s1 + $0x5b8] sm:$0xff]
          %v398 = vld [vmem:[%s1 + $0x5c0] sm:$0xff]
          %v399 = vld [vmem:[%s1 + $0x5c8] sm:$0xff]
          %v400 = vld [vmem:[%s1 + $0x5d0] sm:$0xff]
          %v401 = vld [vmem:[%s1 + $0x5d8] sm:$0xff]
          %v402 = vld [vmem:[%s1 + $0x5e0] sm:$0xff]
          %v403 = vld [vmem:[%s1 + $0x5e8] sm:$0xff]
          %v404 = vld [vmem:[%s1 + $0x5f0] sm:$0xff]
          %v405 = vld [vmem:[%s1 + $0x5f8] sm:$0xff]
          %406 = vmatprep.subr.mxu0 %v305
          %407 = vmatpush1.msra.mxu0 %v304
          %408 = vmatprep.subr.mxu0 %v299
          %409 = vmatpush1.msra.mxu0 %v298
          %410 = vmatprep.subr.mxu0 %v293
          %411 = vmatpush1.msra.mxu0 %v292
          %412 = vmatprep.subr.mxu0 %v287
          %413 = vmatpush1.msra.mxu0 %v286
          %414 = vmatprep.subr.mxu0 %v281
          %415 = vmatpush1.msra.mxu0 %v280
          %416 = vmatprep.subr.mxu0 %v275
          %417 = vmatpush1.msra.mxu0 %v274
          %418 = vmatprep.subr.mxu0 %v269
          %419 = vmatpush1.msra.mxu0 %v268
          %420 = vmatprep.subr.mxu0 %v263
          %421 = vmatpush1.msra.mxu0 %v262
          %422 = vmatprep.subr.mxu0 %v257
          %423 = vmatpush1.msra.mxu0 %v256
          %424 = vmatprep.subr.mxu0 %v251
          %425 = vmatpush1.msra.mxu0 %v250
          %426 = vmatprep.subr.mxu0 %v245
          %427 = vmatpush1.msra.mxu0 %v244
          %428 = vmatprep.subr.mxu0 %v239
          %429 = vmatpush1.msra.mxu0 %v238
          %430 = vmatprep.subr.mxu0 %v233
          %431 = vmatpush1.msra.mxu0 %v232
          %432 = vmatprep.subr.mxu0 %v227
          %433 = vmatpush1.msra.mxu0 %v226
          %434 = vmatprep.subr.mxu0 %v221
          %435 = vmatpush1.msra.mxu0 %v220
          %436 = vmatprep.subr.mxu0 %v215
          %437 = vmatpush1.msra.mxu0 %v214
          %438 = vmatprep.subr.mxu0 %v401
          %439 = vmatpush2.msra.mxu0 %v400
          %440 = vmatprep.subr.mxu0 %v395
          %441 = vmatpush2.msra.mxu0 %v394
          %442 = vmatprep.subr.mxu0 %v389
          %443 = vmatpush2.msra.mxu0 %v388
          %444 = vmatprep.subr.mxu0 %v383
          %445 = vmatpush2.msra.mxu0 %v382
          %446 = vmatprep.subr.mxu0 %v377
          %447 = vmatpush2.msra.mxu0 %v376
          %448 = vmatprep.subr.mxu0 %v371
          %449 = vmatpush2.msra.mxu0 %v370
          %450 = vmatprep.subr.mxu0 %v365
          %451 = vmatpush2.msra.mxu0 %v364
          %452 = vmatprep.subr.mxu0 %v359
          %453 = vmatpush2.msra.mxu0 %v358
          %454 = vmatprep.subr.mxu0 %v353
          %455 = vmatpush2.msra.mxu0 %v352
          %456 = vmatprep.subr.mxu0 %v347
          %457 = vmatpush2.msra.mxu0 %v346
          %458 = vmatprep.subr.mxu0 %v341
          %459 = vmatpush2.msra.mxu0 %v340
          %460 = vmatprep.subr.mxu0 %v335
          %461 = vmatpush2.msra.mxu0 %v334
          %462 = vmatprep.subr.mxu0 %v329
          %463 = vmatpush2.msra.mxu0 %v328
          %464 = vmatprep.subr.mxu0 %v323
          %465 = vmatpush2.msra.mxu0 %v322
          %466 = vmatprep.subr.mxu0 %v317
          %467 = vmatpush2.msra.mxu0 %v316
          %468 = vmatprep.subr.mxu0 %v311
          %469 = vmatpush2.msra.mxu0 %v310
          %470 = vmatprep.mubr.f32.mxu0 %v213
          %471 = vmatmul.mubr.f32.gmra.mxu0 %v212
          %v472 = vpop.f32.mrf.mxu0
          %v473 = vadd.f32 0.0, %v472
          %v474 = vpop.f32.mrf.mxu0
          %v475 = vadd.f32 0.0, %v474
          %476 = vdwg.mxu0
          %477 = vmatprep.subr.mxu0 %v307
          %478 = vmatpush1.msra.mxu0 %v306
          %479 = vmatprep.subr.mxu0 %v301
          %480 = vmatpush1.msra.mxu0 %v300
          %481 = vmatprep.subr.mxu0 %v295
          %482 = vmatpush1.msra.mxu0 %v294
          %483 = vmatprep.subr.mxu0 %v289
          %484 = vmatpush1.msra.mxu0 %v288
          %485 = vmatprep.subr.mxu0 %v283
          %486 = vmatpush1.msra.mxu0 %v282
          %487 = vmatprep.subr.mxu0 %v277
          %488 = vmatpush1.msra.mxu0 %v276
          %489 = vmatprep.subr.mxu0 %v271
          %490 = vmatpush1.msra.mxu0 %v270
          %491 = vmatprep.subr.mxu0 %v265
          %492 = vmatpush1.msra.mxu0 %v264
          %493 = vmatprep.subr.mxu0 %v259
          %494 = vmatpush1.msra.mxu0 %v258
          %495 = vmatprep.subr.mxu0 %v253
          %496 = vmatpush1.msra.mxu0 %v252
          %497 = vmatprep.subr.mxu0 %v247
          %498 = vmatpush1.msra.mxu0 %v246
          %499 = vmatprep.subr.mxu0 %v241
          %500 = vmatpush1.msra.mxu0 %v240
          %501 = vmatprep.subr.mxu0 %v235
          %502 = vmatpush1.msra.mxu0 %v234
          %503 = vmatprep.subr.mxu0 %v229
          %504 = vmatpush1.msra.mxu0 %v228
          %505 = vmatprep.subr.mxu0 %v223
          %506 = vmatpush1.msra.mxu0 %v222
          %507 = vmatprep.subr.mxu0 %v217
          %508 = vmatpush1.msra.mxu0 %v216
          %509 = vmatprep.subr.mxu0 %v403
          %510 = vmatpush2.msra.mxu0 %v402
          %511 = vmatprep.subr.mxu0 %v397
          %512 = vmatpush2.msra.mxu0 %v396
          %513 = vmatprep.subr.mxu0 %v391
          %514 = vmatpush2.msra.mxu0 %v390
          %515 = vmatprep.subr.mxu0 %v385
          %516 = vmatpush2.msra.mxu0 %v384
          %517 = vmatprep.subr.mxu0 %v379
          %518 = vmatpush2.msra.mxu0 %v378
          %519 = vmatprep.subr.mxu0 %v373
          %520 = vmatpush2.msra.mxu0 %v372
          %521 = vmatprep.subr.mxu0 %v367
          %522 = vmatpush2.msra.mxu0 %v366
          %523 = vmatprep.subr.mxu0 %v361
          %524 = vmatpush2.msra.mxu0 %v360
          %525 = vmatprep.subr.mxu0 %v355
          %526 = vmatpush2.msra.mxu0 %v354
          %527 = vmatprep.subr.mxu0 %v349
          %528 = vmatpush2.msra.mxu0 %v348
          %529 = vmatprep.subr.mxu0 %v343
          %530 = vmatpush2.msra.mxu0 %v342
          %531 = vmatprep.subr.mxu0 %v337
          %532 = vmatpush2.msra.mxu0 %v336
          %533 = vmatprep.subr.mxu0 %v331
          %534 = vmatpush2.msra.mxu0 %v330
          %535 = vmatprep.subr.mxu0 %v325
          %536 = vmatpush2.msra.mxu0 %v324
          %537 = vmatprep.subr.mxu0 %v319
          %538 = vmatpush2.msra.mxu0 %v318
          %539 = vmatprep.subr.mxu0 %v313
          %540 = vmatpush2.msra.mxu0 %v312
          %541 = vmatprep.mubr.f32.mxu0 %v213
          %542 = vmatmul.mubr.f32.gmra.mxu0 %v212
          %v543 = vpop.f32.mrf.mxu0
          %v544 = vadd.f32 0.0, %v543
          %v545 = vpop.f32.mrf.mxu0
          %v546 = vadd.f32 0.0, %v545
          %547 = vdwg.mxu0
          %548 = vmatprep.subr.mxu0 %v309
          %549 = vmatpush1.msra.mxu0 %v308
          %550 = vmatprep.subr.mxu0 %v303
          %551 = vmatpush1.msra.mxu0 %v302
          %552 = vmatprep.subr.mxu0 %v297
          %553 = vmatpush1.msra.mxu0 %v296
          %554 = vmatprep.subr.mxu0 %v291
          %555 = vmatpush1.msra.mxu0 %v290
          %556 = vmatprep.subr.mxu0 %v285
          %557 = vmatpush1.msra.mxu0 %v284
          %558 = vmatprep.subr.mxu0 %v279
          %559 = vmatpush1.msra.mxu0 %v278
          %560 = vmatprep.subr.mxu0 %v273
          %561 = vmatpush1.msra.mxu0 %v272
          %562 = vmatprep.subr.mxu0 %v267
          %563 = vmatpush1.msra.mxu0 %v266
          %564 = vmatprep.subr.mxu0 %v261
          %565 = vmatpush1.msra.mxu0 %v260
          %566 = vmatprep.subr.mxu0 %v255
          %567 = vmatpush1.msra.mxu0 %v254
          %568 = vmatprep.subr.mxu0 %v249
          %569 = vmatpush1.msra.mxu0 %v248
          %570 = vmatprep.subr.mxu0 %v243
          %571 = vmatpush1.msra.mxu0 %v242
          %572 = vmatprep.subr.mxu0 %v237
          %573 = vmatpush1.msra.mxu0 %v236
          %574 = vmatprep.subr.mxu0 %v231
          %575 = vmatpush1.msra.mxu0 %v230
          %576 = vmatprep.subr.mxu0 %v225
          %577 = vmatpush1.msra.mxu0 %v224
          %578 = vmatprep.subr.mxu0 %v219
          %579 = vmatpush1.msra.mxu0 %v218
          %580 = vmatprep.subr.mxu0 %v405
          %581 = vmatpush2.msra.mxu0 %v404
          %582 = vmatprep.subr.mxu0 %v399
          %583 = vmatpush2.msra.mxu0 %v398
          %584 = vmatprep.subr.mxu0 %v393
          %585 = vmatpush2.msra.mxu0 %v392
          %586 = vmatprep.subr.mxu0 %v387
          %587 = vmatpush2.msra.mxu0 %v386
          %588 = vmatprep.subr.mxu0 %v381
          %589 = vmatpush2.msra.mxu0 %v380
          %590 = vmatprep.subr.mxu0 %v375
          %591 = vmatpush2.msra.mxu0 %v374
          %592 = vmatprep.subr.mxu0 %v369
          %593 = vmatpush2.msra.mxu0 %v368
          %594 = vmatprep.subr.mxu0 %v363
          %595 = vmatpush2.msra.mxu0 %v362
          %596 = vmatprep.subr.mxu0 %v357
          %597 = vmatpush2.msra.mxu0 %v356
          %598 = vmatprep.subr.mxu0 %v351
          %599 = vmatpush2.msra.mxu0 %v350
          %600 = vmatprep.subr.mxu0 %v345
          %601 = vmatpush2.msra.mxu0 %v344
          %602 = vmatprep.subr.mxu0 %v339
          %603 = vmatpush2.msra.mxu0 %v338
          %604 = vmatprep.subr.mxu0 %v333
          %605 = vmatpush2.msra.mxu0 %v332
          %606 = vmatprep.subr.mxu0 %v327
          %607 = vmatpush2.msra.mxu0 %v326
          %608 = vmatprep.subr.mxu0 %v321
          %609 = vmatpush2.msra.mxu0 %v320
          %610 = vmatprep.subr.mxu0 %v315
          %611 = vmatpush2.msra.mxu0 %v314
          %612 = vmatprep.mubr.f32.mxu0 %v213
          %613 = vmatmul.mubr.f32.gmra.mxu0 %v212
          %v614 = vpop.f32.mrf.mxu0
          %v615 = vadd.f32 0.0, %v614
          %v616 = vpop.f32.mrf.mxu0
          %v617 = vadd.f32 0.0, %v616
          %618 = vdwg.mxu0
          %619 = vst [vmem:[#allocation2] sm:$0xff] %v473
          %620 = vst [vmem:[#allocation2 + $0x8] sm:$0xff] %v475
          %621 = vst [vmem:[#allocation2 + $0x10] sm:$0xff] %v544
          %622 = vst [vmem:[#allocation2 + $0x18] sm:$0xff] %v546
          %623 = vst [vmem:[#allocation2 + $0x20] sm:$0xff] %v615
          %624 = vst [vmem:[#allocation2 + $0x28] sm:$0xff] %v617
          %vm625 = vcmask 7168
          %626 = vst.msk [vmem:[#allocation3] sm:$0xff] %vm625, -1e+30
          %627 = vst.msk [vmem:[#allocation3 + $0x8] sm:$0xff] %vm625, -1e+30
          %628 = vst.msk [vmem:[#allocation3 + $0x10] sm:$0xff] %vm625, -1e+30
          %629 = vst.msk [vmem:[#allocation3 + $0x18] sm:$0xff] %vm625, -1e+30
          %630 = vst.msk [vmem:[#allocation4] sm:$0xff] %vm625, 0.0
          %631 = vst.msk [vmem:[#allocation4 + $0x8] sm:$0xff] %vm625, 0.0
          %632 = vst.msk [vmem:[#allocation4 + $0x10] sm:$0xff] %vm625, 0.0
          %633 = vst.msk [vmem:[#allocation4 + $0x18] sm:$0xff] %vm625, 0.0
          %vm634 = vcmask 523264
          %635 = vst.msk [vmem:[#allocation5] sm:$0xff] %vm634, 0.0
          %636 = vst.msk [vmem:[#allocation5 + $0x8] sm:$0xff] %vm634, 0.0
          %637 = vst.msk [vmem:[#allocation5 + $0x10] sm:$0xff] %vm634, 0.0
          %638 = vst.msk [vmem:[#allocation5 + $0x18] sm:$0xff] %vm634, 0.0
        $region40: #{multi_head_attention.1} parent=35 // pred_fallthru
          _
        %s639 = smul.u32 %s23, 8
        %v640 = vlaneseq
        %v641 = vshrl.u32 %v640, 7
        %v642 = vlaneseq
        %v643 = vand.u32 %v642, 127
        %v644 = vstv %s639
        %v645 = vadd.s32 %v643, %v644
        %vm646 = vcmp.ge.s32.totalorder %v641, %v645
        %v647 = vld [vmem:[#allocation2] sm:$0xff]
        %s648 = sshra.s32 %s639, 3
        %s649 = sand.u32 %s639, 7
        %s650 = smul.u32 %s648, 6
        %s651 = smul.addr %s650, 8
        %s652 = scalar_lea.vmem [#allocation2], %s651
        %v653 = vld [vmem:[%s652 + $0x10] sm:$0xff]
        %v654 = vld [vmem:[%s652 + $0x20] sm:$0xff]
        %vm655 = vcmask 523264
        %v657 = vsel %vm655, %v647, 0
        %v660 = vsel %vm655, %v653, 0
        %662 = vmatprep.subr.mxu0 0.0
        %663 = vmatpush1.xpose.msra.mxu0 0.0
        %664 = vmatprep.subr.mxu0 0.0
        %665 = vmatpush1.xpose.msra.mxu0 0.0
        %666 = vmatprep.subr.mxu0 0.0
        %667 = vmatpush1.xpose.msra.mxu0 0.0
        %668 = vmatprep.subr.mxu0 0.0
        %669 = vmatpush1.xpose.msra.mxu0 0.0
        %670 = vmatprep.subr.mxu0 0.0
        %671 = vmatpush1.xpose.msra.mxu0 0.0
        %672 = vmatprep.subr.mxu0 0.0
        %673 = vmatpush1.xpose.msra.mxu0 0.0
        %674 = vmatprep.subr.mxu0 0.0
        %675 = vmatpush1.xpose.msra.mxu0 0.0
        %676 = vmatprep.subr.mxu0 0.0
        %677 = vmatpush1.xpose.msra.mxu0 0.0
        %678 = vmatprep.subr.mxu0 0.0
        %679 = vmatpush1.xpose.msra.mxu0 0.0
        %680 = vmatprep.subr.mxu0 0.0
        %681 = vmatpush1.xpose.msra.mxu0 0.0
        %682 = vmatprep.subr.mxu0 0.0
        %683 = vmatpush1.xpose.msra.mxu0 0.0
        %684 = vmatprep.subr.mxu0 0.0
        %685 = vmatpush1.xpose.msra.mxu0 0.0
        %686 = vmatprep.subr.mxu0 0.0
        %687 = vmatpush1.xpose.msra.mxu0 0.0
        %688 = vmatprep.subr.mxu0 0.0
        %689 = vmatpush1.xpose.msra.mxu0 0.0
        %690 = vmatprep.subr.mxu0 0.0
        %691 = vmatpush1.xpose.msra.mxu0 0.0
        %692 = vmatprep.subr.mxu0 0.0
        %693 = vmatpush1.xpose.msra.mxu0 %v660
        %694 = vmatprep.subr.mxu0 0.0
        %695 = vmatpush2.xpose.msra.mxu0 0.0
        %696 = vmatprep.subr.mxu0 0.0
        %697 = vmatpush2.xpose.msra.mxu0 0.0
        %698 = vmatprep.subr.mxu0 0.0
        %699 = vmatpush2.xpose.msra.mxu0 0.0
        %700 = vmatprep.subr.mxu0 0.0
        %701 = vmatpush2.xpose.msra.mxu0 0.0
        %702 = vmatprep.subr.mxu0 0.0
        %703 = vmatpush2.xpose.msra.mxu0 0.0
        %704 = vmatprep.subr.mxu0 0.0
        %705 = vmatpush2.xpose.msra.mxu0 0.0
        %706 = vmatprep.subr.mxu0 0.0
        %707 = vmatpush2.xpose.msra.mxu0 0.0
        %708 = vmatprep.subr.mxu0 0.0
        %709 = vmatpush2.xpose.msra.mxu0 0.0
        %710 = vmatprep.subr.mxu0 0.0
        %711 = vmatpush2.xpose.msra.mxu0 0.0
        %712 = vmatprep.subr.mxu0 0.0
        %713 = vmatpush2.xpose.msra.mxu0 0.0
        %714 = vmatprep.subr.mxu0 0.0
        %715 = vmatpush2.xpose.msra.mxu0 0.0
        %716 = vmatprep.subr.mxu0 0.0
        %717 = vmatpush2.xpose.msra.mxu0 0.0
        %718 = vmatprep.subr.mxu0 0.0
        %719 = vmatpush2.xpose.msra.mxu0 0.0
        %720 = vmatprep.subr.mxu0 0.0
        %721 = vmatpush2.xpose.msra.mxu0 0.0
        %722 = vmatprep.subr.mxu0 0.0
        %723 = vmatpush2.xpose.msra.mxu0 0.0
        %724 = vmatprep.subr.mxu0 0.0
        %725 = vmatpush2.xpose.msra.mxu0 0.0
        %726 = vmatprep.mubr.f32.mxu0 0.0
        %727 = vmatmul.mubr.f32.gmra.mxu0 %v657
        %v728 = vpop.f32.mrf.mxu0
        %v729 = vadd.f32 0.0, %v728
        %v730 = vpop.f32.mrf.mxu0
        %731 = vdwg.mxu0
        %v732 = vsel %vm646, %v729, -1e+30
        %v733 = vld [vmem:[#allocation3] sm:$0xff]
        %vm734 = vcmask 64512
        %v735 = vsel %vm734, %v732, -inf
        %736 = vmax.xlane.f32.xlu0 %v735
        %v737 = vpop.xlane.xlu0 %736
        %v738 = vmax.f32 %v733, %v737
        %v739 = vsub.f32 %v733, %v738
        %v740 = vmul.f32 %v739, 1.442695
        %v741 = vpow.pop %v740
        %743 = vset.pattern.permute.xlu0 0
        %744 = vperm.xlu0 %743, %v738
        %v745 = vpop.permute.xlu0 %744
        %v747 = vsub.f32 %v732, %v745
        %v748 = vmul.f32 %v747, 1.442695
        %v749 = vpow.pop %v748
        %v750 = vld [vmem:[#allocation4] sm:$0xff]
        %v751 = vmul.f32 %v741, %v750
        %v752 = vsel %vm734, %v749, 0.0
        %753 = vadd.xlane.f32.xlu0 %v752
        %v754 = vpop.xlane.xlu0 %753
        %v755 = vadd.f32 %v751, %v754
        %vm756 = vcmask 7168
        %757 = vst.msk [vmem:[#allocation4] sm:$0xff] %vm756, %v755
        %v758 = vld [vmem:[#allocation5] sm:$0xff]
        %760 = vset.pattern.permute.xlu0 0
        %761 = vperm.xlu0 %760, %v741
        %v762 = vpop.permute.xlu0 %761
        %v764 = vmul.f32 %v762, %v758
        %v766 = vsel %vm734, %v749, 0
        %768 = vmatprep.subr.mxu0 0.0
        %769 = vmatpush1.msra.mxu0 0.0
        %770 = vmatprep.subr.mxu0 0.0
        %771 = vmatpush1.msra.mxu0 0.0
        %772 = vmatprep.subr.mxu0 0.0
        %773 = vmatpush1.msra.mxu0 0.0
        %774 = vmatprep.subr.mxu0 0.0
        %775 = vmatpush1.msra.mxu0 0.0
        %776 = vmatprep.subr.mxu0 0.0
        %777 = vmatpush1.msra.mxu0 0.0
        %778 = vmatprep.subr.mxu0 0.0
        %779 = vmatpush1.msra.mxu0 0.0
        %780 = vmatprep.subr.mxu0 0.0
        %781 = vmatpush1.msra.mxu0 0.0
        %782 = vmatprep.subr.mxu0 0.0
        %783 = vmatpush1.msra.mxu0 0.0
        %784 = vmatprep.subr.mxu0 0.0
        %785 = vmatpush1.msra.mxu0 0.0
        %786 = vmatprep.subr.mxu0 0.0
        %787 = vmatpush1.msra.mxu0 0.0
        %788 = vmatprep.subr.mxu0 0.0
        %789 = vmatpush1.msra.mxu0 0.0
        %790 = vmatprep.subr.mxu0 0.0
        %791 = vmatpush1.msra.mxu0 0.0
        %792 = vmatprep.subr.mxu0 0.0
        %793 = vmatpush1.msra.mxu0 0.0
        %794 = vmatprep.subr.mxu0 0.0
        %795 = vmatpush1.msra.mxu0 0.0
        %796 = vmatprep.subr.mxu0 0.0
        %797 = vmatpush1.msra.mxu0 0.0
        %798 = vmatprep.subr.mxu0 0.0
        %799 = vmatpush1.msra.mxu0 %v654
        %800 = vmatprep.subr.mxu0 0.0
        %801 = vmatpush2.msra.mxu0 0.0
        %802 = vmatprep.subr.mxu0 0.0
        %803 = vmatpush2.msra.mxu0 0.0
        %804 = vmatprep.subr.mxu0 0.0
        %805 = vmatpush2.msra.mxu0 0.0
        %806 = vmatprep.subr.mxu0 0.0
        %807 = vmatpush2.msra.mxu0 0.0
        %808 = vmatprep.subr.mxu0 0.0
        %809 = vmatpush2.msra.mxu0 0.0
        %810 = vmatprep.subr.mxu0 0.0
        %811 = vmatpush2.msra.mxu0 0.0
        %812 = vmatprep.subr.mxu0 0.0
        %813 = vmatpush2.msra.mxu0 0.0
        %814 = vmatprep.subr.mxu0 0.0
        %815 = vmatpush2.msra.mxu0 0.0
        %816 = vmatprep.subr.mxu0 0.0
        %817 = vmatpush2.msra.mxu0 0.0
        %818 = vmatprep.subr.mxu0 0.0
        %819 = vmatpush2.msra.mxu0 0.0
        %820 = vmatprep.subr.mxu0 0.0
        %821 = vmatpush2.msra.mxu0 0.0
        %822 = vmatprep.subr.mxu0 0.0
        %823 = vmatpush2.msra.mxu0 0.0
        %824 = vmatprep.subr.mxu0 0.0
        %825 = vmatpush2.msra.mxu0 0.0
        %826 = vmatprep.subr.mxu0 0.0
        %827 = vmatpush2.msra.mxu0 0.0
        %828 = vmatprep.subr.mxu0 0.0
        %829 = vmatpush2.msra.mxu0 0.0
        %830 = vmatprep.subr.mxu0 0.0
        %831 = vmatpush2.msra.mxu0 0.0
        %832 = vmatprep.mubr.f32.mxu0 0.0
        %833 = vmatmul.mubr.f32.gmra.mxu0 %v766
        %v834 = vpop.f32.mrf.mxu0
        %v835 = vadd.f32 0.0, %v834
        %v836 = vpop.f32.mrf.mxu0
        %837 = vdwg.mxu0
        %v838 = vadd.f32 %v764, %v835
        %839 = vst.msk [vmem:[#allocation5] sm:$0xff] %vm655, %v838
        %840 = vst.msk [vmem:[#allocation3] sm:$0xff] %vm756, %v738
        %v841 = vld [vmem:[#allocation2] sm:$0xff]
        %v842 = vld [vmem:[%s652 + $0x10] sm:$0xff]
        %v843 = vld [vmem:[%s652 + $0x20] sm:$0xff]
        %845 = vrot.lane.b32.xlu0 %v841, 64
        %v846 = vpop.permute.xlu0 %845
        %848 = vrot.lane.b32.xlu0 %v842, 64
        %v849 = vpop.permute.xlu0 %848
        %v850 = vsel %vm655, %v846, 0
        %v852 = vsel %vm655, %v849, 0
        %854 = vmatprep.subr.mxu0 0.0
        %855 = vmatpush1.xpose.msra.mxu0 0.0
        %856 = vmatprep.subr.mxu0 0.0
        %857 = vmatpush1.xpose.msra.mxu0 0.0
        %858 = vmatprep.subr.mxu0 0.0
        %859 = vmatpush1.xpose.msra.mxu0 0.0
        %860 = vmatprep.subr.mxu0 0.0
        %861 = vmatpush1.xpose.msra.mxu0 0.0
        %862 = vmatprep.subr.mxu0 0.0
        %863 = vmatpush1.xpose.msra.mxu0 0.0
        %864 = vmatprep.subr.mxu0 0.0
        %865 = vmatpush1.xpose.msra.mxu0 0.0
        %866 = vmatprep.subr.mxu0 0.0
        %867 = vmatpush1.xpose.msra.mxu0 0.0
        %868 = vmatprep.subr.mxu0 0.0
        %869 = vmatpush1.xpose.msra.mxu0 0.0
        %870 = vmatprep.subr.mxu0 0.0
        %871 = vmatpush1.xpose.msra.mxu0 0.0
        %872 = vmatprep.subr.mxu0 0.0
        %873 = vmatpush1.xpose.msra.mxu0 0.0
        %874 = vmatprep.subr.mxu0 0.0
        %875 = vmatpush1.xpose.msra.mxu0 0.0
        %876 = vmatprep.subr.mxu0 0.0
        %877 = vmatpush1.xpose.msra.mxu0 0.0
        %878 = vmatprep.subr.mxu0 0.0
        %879 = vmatpush1.xpose.msra.mxu0 0.0
        %880 = vmatprep.subr.mxu0 0.0
        %881 = vmatpush1.xpose.msra.mxu0 0.0
        %882 = vmatprep.subr.mxu0 0.0
        %883 = vmatpush1.xpose.msra.mxu0 0.0
        %884 = vmatprep.subr.mxu0 0.0
        %885 = vmatpush1.xpose.msra.mxu0 %v852
        %886 = vmatprep.subr.mxu0 0.0
        %887 = vmatpush2.xpose.msra.mxu0 0.0
        %888 = vmatprep.subr.mxu0 0.0
        %889 = vmatpush2.xpose.msra.mxu0 0.0
        %890 = vmatprep.subr.mxu0 0.0
        %891 = vmatpush2.xpose.msra.mxu0 0.0
        %892 = vmatprep.subr.mxu0 0.0
        %893 = vmatpush2.xpose.msra.mxu0 0.0
        %894 = vmatprep.subr.mxu0 0.0
        %895 = vmatpush2.xpose.msra.mxu0 0.0
        %896 = vmatprep.subr.mxu0 0.0
        %897 = vmatpush2.xpose.msra.mxu0 0.0
        %898 = vmatprep.subr.mxu0 0.0
        %899 = vmatpush2.xpose.msra.mxu0 0.0
        %900 = vmatprep.subr.mxu0 0.0
        %901 = vmatpush2.xpose.msra.mxu0 0.0
        %902 = vmatprep.subr.mxu0 0.0
        %903 = vmatpush2.xpose.msra.mxu0 0.0
        %904 = vmatprep.subr.mxu0 0.0
        %905 = vmatpush2.xpose.msra.mxu0 0.0
        %906 = vmatprep.subr.mxu0 0.0
        %907 = vmatpush2.xpose.msra.mxu0 0.0
        %908 = vmatprep.subr.mxu0 0.0
        %909 = vmatpush2.xpose.msra.mxu0 0.0
        %910 = vmatprep.subr.mxu0 0.0
        %911 = vmatpush2.xpose.msra.mxu0 0.0
        %912 = vmatprep.subr.mxu0 0.0
        %913 = vmatpush2.xpose.msra.mxu0 0.0
        %914 = vmatprep.subr.mxu0 0.0
        %915 = vmatpush2.xpose.msra.mxu0 0.0
        %916 = vmatprep.subr.mxu0 0.0
        %917 = vmatpush2.xpose.msra.mxu0 0.0
        %918 = vmatprep.mubr.f32.mxu0 0.0
        %919 = vmatmul.mubr.f32.gmra.mxu0 %v850
        %v920 = vpop.f32.mrf.mxu0
        %v921 = vadd.f32 0.0, %v920
        %v922 = vpop.f32.mrf.mxu0
        %923 = vdwg.mxu0
        %v924 = vsel %vm646, %v921, -1e+30
        %s925 = scalar_lea.vmem [#allocation3], 8
        %v926 = vld [vmem:[%s925] sm:$0xff]
        %v927 = vsel %vm734, %v924, -inf
        %928 = vmax.xlane.f32.xlu0 %v927
        %v929 = vpop.xlane.xlu0 %928
        %v930 = vmax.f32 %v926, %v929
        %v931 = vsub.f32 %v926, %v930
        %v932 = vmul.f32 %v931, 1.442695
        %v933 = vpow.pop %v932
        %935 = vset.pattern.permute.xlu0 0
        %936 = vperm.xlu0 %935, %v930
        %v937 = vpop.permute.xlu0 %936
        %v939 = vsub.f32 %v924, %v937
        %v940 = vmul.f32 %v939, 1.442695
        %v941 = vpow.pop %v940
        %s942 = scalar_lea.vmem [#allocation4], 8
        %v943 = vld [vmem:[%s942] sm:$0xff]
        %v944 = vmul.f32 %v933, %v943
        %v945 = vsel %vm734, %v941, 0.0
        %946 = vadd.xlane.f32.xlu0 %v945
        %v947 = vpop.xlane.xlu0 %946
        %v948 = vadd.f32 %v944, %v947
        %949 = vst.msk [vmem:[%s942] sm:$0xff] %vm756, %v948
        %s950 = scalar_lea.vmem [#allocation5], 8
        %v951 = vld [vmem:[%s950] sm:$0xff]
        %953 = vset.pattern.permute.xlu0 0
        %954 = vperm.xlu0 %953, %v933
        %v955 = vpop.permute.xlu0 %954
        %v957 = vmul.f32 %v955, %v951
        %959 = vrot.lane.b32.xlu0 %v843, 64
        %v960 = vpop.permute.xlu0 %959
        %v963 = vsel %vm734, %v941, 0
        %965 = vmatprep.subr.mxu0 0.0
        %966 = vmatpush1.msra.mxu0 0.0
        %967 = vmatprep.subr.mxu0 0.0
        %968 = vmatpush1.msra.mxu0 0.0
        %969 = vmatprep.subr.mxu0 0.0
        %970 = vmatpush1.msra.mxu0 0.0
        %971 = vmatprep.subr.mxu0 0.0
        %972 = vmatpush1.msra.mxu0 0.0
        %973 = vmatprep.subr.mxu0 0.0
        %974 = vmatpush1.msra.mxu0 0.0
        %975 = vmatprep.subr.mxu0 0.0
        %976 = vmatpush1.msra.mxu0 0.0
        %977 = vmatprep.subr.mxu0 0.0
        %978 = vmatpush1.msra.mxu0 0.0
        %979 = vmatprep.subr.mxu0 0.0
        %980 = vmatpush1.msra.mxu0 0.0
        %981 = vmatprep.subr.mxu0 0.0
        %982 = vmatpush1.msra.mxu0 0.0
        %983 = vmatprep.subr.mxu0 0.0
        %984 = vmatpush1.msra.mxu0 0.0
        %985 = vmatprep.subr.mxu0 0.0
        %986 = vmatpush1.msra.mxu0 0.0
        %987 = vmatprep.subr.mxu0 0.0
        %988 = vmatpush1.msra.mxu0 0.0
        %989 = vmatprep.subr.mxu0 0.0
        %990 = vmatpush1.msra.mxu0 0.0
        %991 = vmatprep.subr.mxu0 0.0
        %992 = vmatpush1.msra.mxu0 0.0
        %993 = vmatprep.subr.mxu0 0.0
        %994 = vmatpush1.msra.mxu0 0.0
        %995 = vmatprep.subr.mxu0 0.0
        %996 = vmatpush1.msra.mxu0 %v960
        %997 = vmatprep.subr.mxu0 0.0
        %998 = vmatpush2.msra.mxu0 0.0
        %999 = vmatprep.subr.mxu0 0.0
        %1000 = vmatpush2.msra.mxu0 0.0
        %1001 = vmatprep.subr.mxu0 0.0
        %1002 = vmatpush2.msra.mxu0 0.0
        %1003 = vmatprep.subr.mxu0 0.0
        %1004 = vmatpush2.msra.mxu0 0.0
        %1005 = vmatprep.subr.mxu0 0.0
        %1006 = vmatpush2.msra.mxu0 0.0
        %1007 = vmatprep.subr.mxu0 0.0
        %1008 = vmatpush2.msra.mxu0 0.0
        %1009 = vmatprep.subr.mxu0 0.0
        %1010 = vmatpush2.msra.mxu0 0.0
        %1011 = vmatprep.subr.mxu0 0.0
        %1012 = vmatpush2.msra.mxu0 0.0
        %1013 = vmatprep.subr.mxu0 0.0
        %1014 = vmatpush2.msra.mxu0 0.0
        %1015 = vmatprep.subr.mxu0 0.0
        %1016 = vmatpush2.msra.mxu0 0.0
        %1017 = vmatprep.subr.mxu0 0.0
        %1018 = vmatpush2.msra.mxu0 0.0
        %1019 = vmatprep.subr.mxu0 0.0
        %1020 = vmatpush2.msra.mxu0 0.0
        %1021 = vmatprep.subr.mxu0 0.0
        %1022 = vmatpush2.msra.mxu0 0.0
        %1023 = vmatprep.subr.mxu0 0.0
        %1024 = vmatpush2.msra.mxu0 0.0
        %1025 = vmatprep.subr.mxu0 0.0
        %1026 = vmatpush2.msra.mxu0 0.0
        %1027 = vmatprep.subr.mxu0 0.0
        %1028 = vmatpush2.msra.mxu0 0.0
        %1029 = vmatprep.mubr.f32.mxu0 0.0
        %1030 = vmatmul.mubr.f32.gmra.mxu0 %v963
        %v1031 = vpop.f32.mrf.mxu0
        %v1032 = vadd.f32 0.0, %v1031
        %v1033 = vpop.f32.mrf.mxu0
        %1034 = vdwg.mxu0
        %v1035 = vadd.f32 %v957, %v1032
        %1036 = vst.msk [vmem:[%s950] sm:$0xff] %vm655, %v1035
        %1037 = vst.msk [vmem:[%s925] sm:$0xff] %vm756, %v930
        %v1038 = vld [vmem:[#allocation2 + $0x8] sm:$0xff]
        %v1039 = vld [vmem:[%s652 + $0x18] sm:$0xff]
        %v1040 = vld [vmem:[%s652 + $0x28] sm:$0xff]
        %v1042 = vsel %vm655, %v1038, 0
        %v1045 = vsel %vm655, %v1039, 0
        %1047 = vmatprep.subr.mxu0 0.0
        %1048 = vmatpush1.xpose.msra.mxu0 0.0
        %1049 = vmatprep.subr.mxu0 0.0
        %1050 = vmatpush1.xpose.msra.mxu0 0.0
        %1051 = vmatprep.subr.mxu0 0.0
        %1052 = vmatpush1.xpose.msra.mxu0 0.0
        %1053 = vmatprep.subr.mxu0 0.0
        %1054 = vmatpush1.xpose.msra.mxu0 0.0
        %1055 = vmatprep.subr.mxu0 0.0
        %1056 = vmatpush1.xpose.msra.mxu0 0.0
        %1057 = vmatprep.subr.mxu0 0.0
        %1058 = vmatpush1.xpose.msra.mxu0 0.0
        %1059 = vmatprep.subr.mxu0 0.0
        %1060 = vmatpush1.xpose.msra.mxu0 0.0
        %1061 = vmatprep.subr.mxu0 0.0
        %1062 = vmatpush1.xpose.msra.mxu0 0.0
        %1063 = vmatprep.subr.mxu0 0.0
        %1064 = vmatpush1.xpose.msra.mxu0 0.0
        %1065 = vmatprep.subr.mxu0 0.0
        %1066 = vmatpush1.xpose.msra.mxu0 0.0
        %1067 = vmatprep.subr.mxu0 0.0
        %1068 = vmatpush1.xpose.msra.mxu0 0.0
        %1069 = vmatprep.subr.mxu0 0.0
        %1070 = vmatpush1.xpose.msra.mxu0 0.0
        %1071 = vmatprep.subr.mxu0 0.0
        %1072 = vmatpush1.xpose.msra.mxu0 0.0
        %1073 = vmatprep.subr.mxu0 0.0
        %1074 = vmatpush1.xpose.msra.mxu0 0.0
        %1075 = vmatprep.subr.mxu0 0.0
        %1076 = vmatpush1.xpose.msra.mxu0 0.0
        %1077 = vmatprep.subr.mxu0 0.0
        %1078 = vmatpush1.xpose.msra.mxu0 %v1045
        %1079 = vmatprep.subr.mxu0 0.0
        %1080 = vmatpush2.xpose.msra.mxu0 0.0
        %1081 = vmatprep.subr.mxu0 0.0
        %1082 = vmatpush2.xpose.msra.mxu0 0.0
        %1083 = vmatprep.subr.mxu0 0.0
        %1084 = vmatpush2.xpose.msra.mxu0 0.0
        %1085 = vmatprep.subr.mxu0 0.0
        %1086 = vmatpush2.xpose.msra.mxu0 0.0
        %1087 = vmatprep.subr.mxu0 0.0
        %1088 = vmatpush2.xpose.msra.mxu0 0.0
        %1089 = vmatprep.subr.mxu0 0.0
        %1090 = vmatpush2.xpose.msra.mxu0 0.0
        %1091 = vmatprep.subr.mxu0 0.0
        %1092 = vmatpush2.xpose.msra.mxu0 0.0
        %1093 = vmatprep.subr.mxu0 0.0
        %1094 = vmatpush2.xpose.msra.mxu0 0.0
        %1095 = vmatprep.subr.mxu0 0.0
        %1096 = vmatpush2.xpose.msra.mxu0 0.0
        %1097 = vmatprep.subr.mxu0 0.0
        %1098 = vmatpush2.xpose.msra.mxu0 0.0
        %1099 = vmatprep.subr.mxu0 0.0
        %1100 = vmatpush2.xpose.msra.mxu0 0.0
        %1101 = vmatprep.subr.mxu0 0.0
        %1102 = vmatpush2.xpose.msra.mxu0 0.0
        %1103 = vmatprep.subr.mxu0 0.0
        %1104 = vmatpush2.xpose.msra.mxu0 0.0
        %1105 = vmatprep.subr.mxu0 0.0
        %1106 = vmatpush2.xpose.msra.mxu0 0.0
        %1107 = vmatprep.subr.mxu0 0.0
        %1108 = vmatpush2.xpose.msra.mxu0 0.0
        %1109 = vmatprep.subr.mxu0 0.0
        %1110 = vmatpush2.xpose.msra.mxu0 0.0
        %1111 = vmatprep.mubr.f32.mxu0 0.0
        %1112 = vmatmul.mubr.f32.gmra.mxu0 %v1042
        %v1113 = vpop.f32.mrf.mxu0
        %v1114 = vadd.f32 0.0, %v1113
        %v1115 = vpop.f32.mrf.mxu0
        %1116 = vdwg.mxu0
        %v1117 = vsel %vm646, %v1114, -1e+30
        %s1118 = scalar_lea.vmem [#allocation3], 16
        %v1119 = vld [vmem:[%s1118] sm:$0xff]
        %v1120 = vsel %vm734, %v1117, -inf
        %1121 = vmax.xlane.f32.xlu0 %v1120
        %v1122 = vpop.xlane.xlu0 %1121
        %v1123 = vmax.f32 %v1119, %v1122
        %v1124 = vsub.f32 %v1119, %v1123
        %v1125 = vmul.f32 %v1124, 1.442695
        %v1126 = vpow.pop %v1125
        %1128 = vset.pattern.permute.xlu0 0
        %1129 = vperm.xlu0 %1128, %v1123
        %v1130 = vpop.permute.xlu0 %1129
        %v1132 = vsub.f32 %v1117, %v1130
        %v1133 = vmul.f32 %v1132, 1.442695
        %v1134 = vpow.pop %v1133
        %s1135 = scalar_lea.vmem [#allocation4], 16
        %v1136 = vld [vmem:[%s1135] sm:$0xff]
        %v1137 = vmul.f32 %v1126, %v1136
        %v1138 = vsel %vm734, %v1134, 0.0
        %1139 = vadd.xlane.f32.xlu0 %v1138
        %v1140 = vpop.xlane.xlu0 %1139
        %v1141 = vadd.f32 %v1137, %v1140
        %1142 = vst.msk [vmem:[%s1135] sm:$0xff] %vm756, %v1141
        %s1143 = scalar_lea.vmem [#allocation5], 16
        %v1144 = vld [vmem:[%s1143] sm:$0xff]
        %1146 = vset.pattern.permute.xlu0 0
        %1147 = vperm.xlu0 %1146, %v1126
        %v1148 = vpop.permute.xlu0 %1147
        %v1150 = vmul.f32 %v1148, %v1144
        %v1152 = vsel %vm734, %v1134, 0
        %1154 = vmatprep.subr.mxu0 0.0
        %1155 = vmatpush1.msra.mxu0 0.0
        %1156 = vmatprep.subr.mxu0 0.0
        %1157 = vmatpush1.msra.mxu0 0.0
        %1158 = vmatprep.subr.mxu0 0.0
        %1159 = vmatpush1.msra.mxu0 0.0
        %1160 = vmatprep.subr.mxu0 0.0
        %1161 = vmatpush1.msra.mxu0 0.0
        %1162 = vmatprep.subr.mxu0 0.0
        %1163 = vmatpush1.msra.mxu0 0.0
        %1164 = vmatprep.subr.mxu0 0.0
        %1165 = vmatpush1.msra.mxu0 0.0
        %1166 = vmatprep.subr.mxu0 0.0
        %1167 = vmatpush1.msra.mxu0 0.0
        %1168 = vmatprep.subr.mxu0 0.0
        %1169 = vmatpush1.msra.mxu0 0.0
        %1170 = vmatprep.subr.mxu0 0.0
        %1171 = vmatpush1.msra.mxu0 0.0
        %1172 = vmatprep.subr.mxu0 0.0
        %1173 = vmatpush1.msra.mxu0 0.0
        %1174 = vmatprep.subr.mxu0 0.0
        %1175 = vmatpush1.msra.mxu0 0.0
        %1176 = vmatprep.subr.mxu0 0.0
        %1177 = vmatpush1.msra.mxu0 0.0
        %1178 = vmatprep.subr.mxu0 0.0
        %1179 = vmatpush1.msra.mxu0 0.0
        %1180 = vmatprep.subr.mxu0 0.0
        %1181 = vmatpush1.msra.mxu0 0.0
        %1182 = vmatprep.subr.mxu0 0.0
        %1183 = vmatpush1.msra.mxu0 0.0
        %1184 = vmatprep.subr.mxu0 0.0
        %1185 = vmatpush1.msra.mxu0 %v1040
        %1186 = vmatprep.subr.mxu0 0.0
        %1187 = vmatpush2.msra.mxu0 0.0
        %1188 = vmatprep.subr.mxu0 0.0
        %1189 = vmatpush2.msra.mxu0 0.0
        %1190 = vmatprep.subr.mxu0 0.0
        %1191 = vmatpush2.msra.mxu0 0.0
        %1192 = vmatprep.subr.mxu0 0.0
        %1193 = vmatpush2.msra.mxu0 0.0
        %1194 = vmatprep.subr.mxu0 0.0
        %1195 = vmatpush2.msra.mxu0 0.0
        %1196 = vmatprep.subr.mxu0 0.0
        %1197 = vmatpush2.msra.mxu0 0.0
        %1198 = vmatprep.subr.mxu0 0.0
        %1199 = vmatpush2.msra.mxu0 0.0
        %1200 = vmatprep.subr.mxu0 0.0
        %1201 = vmatpush2.msra.mxu0 0.0
        %1202 = vmatprep.subr.mxu0 0.0
        %1203 = vmatpush2.msra.mxu0 0.0
        %1204 = vmatprep.subr.mxu0 0.0
        %1205 = vmatpush2.msra.mxu0 0.0
        %1206 = vmatprep.subr.mxu0 0.0
        %1207 = vmatpush2.msra.mxu0 0.0
        %1208 = vmatprep.subr.mxu0 0.0
        %1209 = vmatpush2.msra.mxu0 0.0
        %1210 = vmatprep.subr.mxu0 0.0
        %1211 = vmatpush2.msra.mxu0 0.0
        %1212 = vmatprep.subr.mxu0 0.0
        %1213 = vmatpush2.msra.mxu0 0.0
        %1214 = vmatprep.subr.mxu0 0.0
        %1215 = vmatpush2.msra.mxu0 0.0
        %1216 = vmatprep.subr.mxu0 0.0
        %1217 = vmatpush2.msra.mxu0 0.0
        %1218 = vmatprep.mubr.f32.mxu0 0.0
        %1219 = vmatmul.mubr.f32.gmra.mxu0 %v1152
        %v1220 = vpop.f32.mrf.mxu0
        %v1221 = vadd.f32 0.0, %v1220
        %v1222 = vpop.f32.mrf.mxu0
        %1223 = vdwg.mxu0
        %v1224 = vadd.f32 %v1150, %v1221
        %1225 = vst.msk [vmem:[%s1143] sm:$0xff] %vm655, %v1224
        %1226 = vst.msk [vmem:[%s1118] sm:$0xff] %vm756, %v1123
        %v1227 = vld [vmem:[#allocation2 + $0x8] sm:$0xff]
        %v1228 = vld [vmem:[%s652 + $0x18] sm:$0xff]
        %v1229 = vld [vmem:[%s652 + $0x28] sm:$0xff]
        %1231 = vrot.lane.b32.xlu0 %v1227, 64
        %v1232 = vpop.permute.xlu0 %1231
        %1234 = vrot.lane.b32.xlu0 %v1228, 64
        %v1235 = vpop.permute.xlu0 %1234
        %v1236 = vsel %vm655, %v1232, 0
        %v1238 = vsel %vm655, %v1235, 0
        %1240 = vmatprep.subr.mxu0 0.0
        %1241 = vmatpush1.xpose.msra.mxu0 0.0
        %1242 = vmatprep.subr.mxu0 0.0
        %1243 = vmatpush1.xpose.msra.mxu0 0.0
        %1244 = vmatprep.subr.mxu0 0.0
        %1245 = vmatpush1.xpose.msra.mxu0 0.0
        %1246 = vmatprep.subr.mxu0 0.0
        %1247 = vmatpush1.xpose.msra.mxu0 0.0
        %1248 = vmatprep.subr.mxu0 0.0
        %1249 = vmatpush1.xpose.msra.mxu0 0.0
        %1250 = vmatprep.subr.mxu0 0.0
        %1251 = vmatpush1.xpose.msra.mxu0 0.0
        %1252 = vmatprep.subr.mxu0 0.0
        %1253 = vmatpush1.xpose.msra.mxu0 0.0
        %1254 = vmatprep.subr.mxu0 0.0
        %1255 = vmatpush1.xpose.msra.mxu0 0.0
        %1256 = vmatprep.subr.mxu0 0.0
        %1257 = vmatpush1.xpose.msra.mxu0 0.0
        %1258 = vmatprep.subr.mxu0 0.0
        %1259 = vmatpush1.xpose.msra.mxu0 0.0
        %1260 = vmatprep.subr.mxu0 0.0
        %1261 = vmatpush1.xpose.msra.mxu0 0.0
        %1262 = vmatprep.subr.mxu0 0.0
        %1263 = vmatpush1.xpose.msra.mxu0 0.0
        %1264 = vmatprep.subr.mxu0 0.0
        %1265 = vmatpush1.xpose.msra.mxu0 0.0
        %1266 = vmatprep.subr.mxu0 0.0
        %1267 = vmatpush1.xpose.msra.mxu0 0.0
        %1268 = vmatprep.subr.mxu0 0.0
        %1269 = vmatpush1.xpose.msra.mxu0 0.0
        %1270 = vmatprep.subr.mxu0 0.0
        %1271 = vmatpush1.xpose.msra.mxu0 %v1238
        %1272 = vmatprep.subr.mxu0 0.0
        %1273 = vmatpush2.xpose.msra.mxu0 0.0
        %1274 = vmatprep.subr.mxu0 0.0
        %1275 = vmatpush2.xpose.msra.mxu0 0.0
        %1276 = vmatprep.subr.mxu0 0.0
        %1277 = vmatpush2.xpose.msra.mxu0 0.0
        %1278 = vmatprep.subr.mxu0 0.0
        %1279 = vmatpush2.xpose.msra.mxu0 0.0
        %1280 = vmatprep.subr.mxu0 0.0
        %1281 = vmatpush2.xpose.msra.mxu0 0.0
        %1282 = vmatprep.subr.mxu0 0.0
        %1283 = vmatpush2.xpose.msra.mxu0 0.0
        %1284 = vmatprep.subr.mxu0 0.0
        %1285 = vmatpush2.xpose.msra.mxu0 0.0
        %1286 = vmatprep.subr.mxu0 0.0
        %1287 = vmatpush2.xpose.msra.mxu0 0.0
        %1288 = vmatprep.subr.mxu0 0.0
        %1289 = vmatpush2.xpose.msra.mxu0 0.0
        %1290 = vmatprep.subr.mxu0 0.0
        %1291 = vmatpush2.xpose.msra.mxu0 0.0
        %1292 = vmatprep.subr.mxu0 0.0
        %1293 = vmatpush2.xpose.msra.mxu0 0.0
        %1294 = vmatprep.subr.mxu0 0.0
        %1295 = vmatpush2.xpose.msra.mxu0 0.0
        %1296 = vmatprep.subr.mxu0 0.0
        %1297 = vmatpush2.xpose.msra.mxu0 0.0
        %1298 = vmatprep.subr.mxu0 0.0
        %1299 = vmatpush2.xpose.msra.mxu0 0.0
        %1300 = vmatprep.subr.mxu0 0.0
        %1301 = vmatpush2.xpose.msra.mxu0 0.0
        %1302 = vmatprep.subr.mxu0 0.0
        %1303 = vmatpush2.xpose.msra.mxu0 0.0
        %1304 = vmatprep.mubr.f32.mxu0 0.0
        %1305 = vmatmul.mubr.f32.gmra.mxu0 %v1236
        %v1306 = vpop.f32.mrf.mxu0
        %v1307 = vadd.f32 0.0, %v1306
        %v1308 = vpop.f32.mrf.mxu0
        %1309 = vdwg.mxu0
        %v1310 = vsel %vm646, %v1307, -1e+30
        %s1311 = scalar_lea.vmem [#allocation3], 24
        %v1312 = vld [vmem:[%s1311] sm:$0xff]
        %v1313 = vsel %vm734, %v1310, -inf
        %1314 = vmax.xlane.f32.xlu0 %v1313
        %v1315 = vpop.xlane.xlu0 %1314
        %v1316 = vmax.f32 %v1312, %v1315
        %v1317 = vsub.f32 %v1312, %v1316
        %v1318 = vmul.f32 %v1317, 1.442695
        %v1319 = vpow.pop %v1318
        %1321 = vset.pattern.permute.xlu0 0
        %1322 = vperm.xlu0 %1321, %v1316
        %v1323 = vpop.permute.xlu0 %1322
        %v1325 = vsub.f32 %v1310, %v1323
        %v1326 = vmul.f32 %v1325, 1.442695
        %v1327 = vpow.pop %v1326
        %s1328 = scalar_lea.vmem [#allocation4], 24
        %v1329 = vld [vmem:[%s1328] sm:$0xff]
        %v1330 = vmul.f32 %v1319, %v1329
        %v1331 = vsel %vm734, %v1327, 0.0
        %1332 = vadd.xlane.f32.xlu0 %v1331
        %v1333 = vpop.xlane.xlu0 %1332
        %v1334 = vadd.f32 %v1330, %v1333
        %1335 = vst.msk [vmem:[%s1328] sm:$0xff] %vm756, %v1334
        %s1336 = scalar_lea.vmem [#allocation5], 24
        %v1337 = vld [vmem:[%s1336] sm:$0xff]
        %1339 = vset.pattern.permute.xlu0 0
        %1340 = vperm.xlu0 %1339, %v1319
        %v1341 = vpop.permute.xlu0 %1340
        %v1343 = vmul.f32 %v1341, %v1337
        %1345 = vrot.lane.b32.xlu0 %v1229, 64
        %v1346 = vpop.permute.xlu0 %1345
        %v1349 = vsel %vm734, %v1327, 0
        %1351 = vmatprep.subr.mxu0 0.0
        %1352 = vmatpush1.msra.mxu0 0.0
        %1353 = vmatprep.subr.mxu0 0.0
        %1354 = vmatpush1.msra.mxu0 0.0
        %1355 = vmatprep.subr.mxu0 0.0
        %1356 = vmatpush1.msra.mxu0 0.0
        %1357 = vmatprep.subr.mxu0 0.0
        %1358 = vmatpush1.msra.mxu0 0.0
        %1359 = vmatprep.subr.mxu0 0.0
        %1360 = vmatpush1.msra.mxu0 0.0
        %1361 = vmatprep.subr.mxu0 0.0
        %1362 = vmatpush1.msra.mxu0 0.0
        %1363 = vmatprep.subr.mxu0 0.0
        %1364 = vmatpush1.msra.mxu0 0.0
        %1365 = vmatprep.subr.mxu0 0.0
        %1366 = vmatpush1.msra.mxu0 0.0
        %1367 = vmatprep.subr.mxu0 0.0
        %1368 = vmatpush1.msra.mxu0 0.0
        %1369 = vmatprep.subr.mxu0 0.0
        %1370 = vmatpush1.msra.mxu0 0.0
        %1371 = vmatprep.subr.mxu0 0.0
        %1372 = vmatpush1.msra.mxu0 0.0
        %1373 = vmatprep.subr.mxu0 0.0
        %1374 = vmatpush1.msra.mxu0 0.0
        %1375 = vmatprep.subr.mxu0 0.0
        %1376 = vmatpush1.msra.mxu0 0.0
        %1377 = vmatprep.subr.mxu0 0.0
        %1378 = vmatpush1.msra.mxu0 0.0
        %1379 = vmatprep.subr.mxu0 0.0
        %1380 = vmatpush1.msra.mxu0 0.0
        %1381 = vmatprep.subr.mxu0 0.0
        %1382 = vmatpush1.msra.mxu0 %v1346
        %1383 = vmatprep.subr.mxu0 0.0
        %1384 = vmatpush2.msra.mxu0 0.0
        %1385 = vmatprep.subr.mxu0 0.0
        %1386 = vmatpush2.msra.mxu0 0.0
        %1387 = vmatprep.subr.mxu0 0.0
        %1388 = vmatpush2.msra.mxu0 0.0
        %1389 = vmatprep.subr.mxu0 0.0
        %1390 = vmatpush2.msra.mxu0 0.0
        %1391 = vmatprep.subr.mxu0 0.0
        %1392 = vmatpush2.msra.mxu0 0.0
        %1393 = vmatprep.subr.mxu0 0.0
        %1394 = vmatpush2.msra.mxu0 0.0
        %1395 = vmatprep.subr.mxu0 0.0
        %1396 = vmatpush2.msra.mxu0 0.0
        %1397 = vmatprep.subr.mxu0 0.0
        %1398 = vmatpush2.msra.mxu0 0.0
        %1399 = vmatprep.subr.mxu0 0.0
        %1400 = vmatpush2.msra.mxu0 0.0
        %1401 = vmatprep.subr.mxu0 0.0
        %1402 = vmatpush2.msra.mxu0 0.0
        %1403 = vmatprep.subr.mxu0 0.0
        %1404 = vmatpush2.msra.mxu0 0.0
        %1405 = vmatprep.subr.mxu0 0.0
        %1406 = vmatpush2.msra.mxu0 0.0
        %1407 = vmatprep.subr.mxu0 0.0
        %1408 = vmatpush2.msra.mxu0 0.0
        %1409 = vmatprep.subr.mxu0 0.0
        %1410 = vmatpush2.msra.mxu0 0.0
        %1411 = vmatprep.subr.mxu0 0.0
        %1412 = vmatpush2.msra.mxu0 0.0
        %1413 = vmatprep.subr.mxu0 0.0
        %1414 = vmatpush2.msra.mxu0 0.0
        %1415 = vmatprep.mubr.f32.mxu0 0.0
        %1416 = vmatmul.mubr.f32.gmra.mxu0 %v1349
        %v1417 = vpop.f32.mrf.mxu0
        %v1418 = vadd.f32 0.0, %v1417
        %v1419 = vpop.f32.mrf.mxu0
        %1420 = vdwg.mxu0
        %v1421 = vadd.f32 %v1343, %v1418
        %1422 = vst.msk [vmem:[%s1336] sm:$0xff] %vm655, %v1421
        %1423 = vst.msk [vmem:[%s1311] sm:$0xff] %vm756, %v1316
        // Predicated region
        $region41: #{multi_head_attention.1} parent=35 // pred_check
          %p1424 = pneg %p208
        $region42: #{multi_head_attention.1} parent=35 // pred_check_branch
          %1426 = sbr.rel (%p1424) target = $region44
        $region43: #{multi_head_attention.1} parent=35 // pred_region
          %v1427 = vld [vmem:[#allocation4] sm:$0xff]
          %v1428 = vrcp.pop %v1427
          %v1429 = vld [vmem:[#allocation5] sm:$0xff]
          %1431 = vset.pattern.permute.xlu0 0
          %1432 = vperm.xlu0 %1431, %v1428
          %v1433 = vpop.permute.xlu0 %1432
          %v1435 = vmul.f32 %v1429, %v1433
          %v1436 = vld [vmem:[%s942] sm:$0xff]
          %v1437 = vrcp.pop %v1436
          %v1438 = vld [vmem:[%s950] sm:$0xff]
          %1440 = vset.pattern.permute.xlu0 0
          %1441 = vperm.xlu0 %1440, %v1437
          %v1442 = vpop.permute.xlu0 %1441
          %v1444 = vmul.f32 %v1438, %v1442
          %v1445 = vld [vmem:[%s1135] sm:$0xff]
          %v1446 = vrcp.pop %v1445
          %v1447 = vld [vmem:[%s1143] sm:$0xff]
          %1449 = vset.pattern.permute.xlu0 0
          %1450 = vperm.xlu0 %1449, %v1446
          %v1451 = vpop.permute.xlu0 %1450
          %v1453 = vmul.f32 %v1447, %v1451
          %v1454 = vld [vmem:[%s1328] sm:$0xff]
          %v1455 = vrcp.pop %v1454
          %v1456 = vld [vmem:[%s1336] sm:$0xff]
          %1458 = vset.pattern.permute.xlu0 0
          %1459 = vperm.xlu0 %1458, %v1455
          %v1460 = vpop.permute.xlu0 %1459
          %v1462 = vmul.f32 %v1456, %v1460
          %1464 = vrot.lane.b32.xlu0 %v1444, 64
          %v1465 = vpop.permute.xlu0 %1464
          %1468 = vrot.lane.b32.xlu0 %v1462, 64
          %v1469 = vpop.permute.xlu0 %1468
          %v1471 = vsel %vm655, %v1435, %v1465
          %v1472 = vsel %vm655, %v1453, %v1469
          %v1473 = vld [vmem:[%s2] sm:$0xff]
          %v1474 = vld [vmem:[%s2 + $0x8] sm:$0xff]
          %v1475 = vld [vmem:[%s2 + $0x10] sm:$0xff]
          %v1476 = vld [vmem:[%s2 + $0x18] sm:$0xff]
          %v1477 = vld [vmem:[%s2 + $0x20] sm:$0xff]
          %v1478 = vld [vmem:[%s2 + $0x28] sm:$0xff]
          %v1479 = vld [vmem:[%s2 + $0x30] sm:$0xff]
          %v1480 = vld [vmem:[%s2 + $0x38] sm:$0xff]
          %v1481 = vld [vmem:[%s2 + $0x40] sm:$0xff]
          %v1482 = vld [vmem:[%s2 + $0x48] sm:$0xff]
          %v1483 = vld [vmem:[%s2 + $0x50] sm:$0xff]
          %v1484 = vld [vmem:[%s2 + $0x58] sm:$0xff]
          %v1485 = vld [vmem:[%s2 + $0x60] sm:$0xff]
          %v1486 = vld [vmem:[%s2 + $0x68] sm:$0xff]
          %v1487 = vld [vmem:[%s2 + $0x70] sm:$0xff]
          %v1488 = vld [vmem:[%s2 + $0x78] sm:$0xff]
          %v1489 = vld [vmem:[%s2 + $0x80] sm:$0xff]
          %v1490 = vld [vmem:[%s2 + $0x88] sm:$0xff]
          %v1491 = vld [vmem:[%s2 + $0x90] sm:$0xff]
          %v1492 = vld [vmem:[%s2 + $0x98] sm:$0xff]
          %v1493 = vld [vmem:[%s2 + $0xa0] sm:$0xff]
          %v1494 = vld [vmem:[%s2 + $0xa8] sm:$0xff]
          %v1495 = vld [vmem:[%s2 + $0xb0] sm:$0xff]
          %v1496 = vld [vmem:[%s2 + $0xb8] sm:$0xff]
          %v1497 = vld [vmem:[%s2 + $0xc0] sm:$0xff]
          %v1498 = vld [vmem:[%s2 + $0xc8] sm:$0xff]
          %v1499 = vld [vmem:[%s2 + $0xd0] sm:$0xff]
          %v1500 = vld [vmem:[%s2 + $0xd8] sm:$0xff]
          %v1501 = vld [vmem:[%s2 + $0xe0] sm:$0xff]
          %v1502 = vld [vmem:[%s2 + $0xe8] sm:$0xff]
          %v1503 = vld [vmem:[%s2 + $0xf0] sm:$0xff]
          %v1504 = vld [vmem:[%s2 + $0xf8] sm:$0xff]
          %v1505 = vld [vmem:[%s2 + $0x100] sm:$0xff]
          %v1506 = vld [vmem:[%s2 + $0x108] sm:$0xff]
          %v1507 = vld [vmem:[%s2 + $0x110] sm:$0xff]
          %v1508 = vld [vmem:[%s2 + $0x118] sm:$0xff]
          %v1509 = vld [vmem:[%s2 + $0x120] sm:$0xff]
          %v1510 = vld [vmem:[%s2 + $0x128] sm:$0xff]
          %v1511 = vld [vmem:[%s2 + $0x130] sm:$0xff]
          %v1512 = vld [vmem:[%s2 + $0x138] sm:$0xff]
          %v1513 = vld [vmem:[%s2 + $0x140] sm:$0xff]
          %v1514 = vld [vmem:[%s2 + $0x148] sm:$0xff]
          %v1515 = vld [vmem:[%s2 + $0x150] sm:$0xff]
          %v1516 = vld [vmem:[%s2 + $0x158] sm:$0xff]
          %v1517 = vld [vmem:[%s2 + $0x160] sm:$0xff]
          %v1518 = vld [vmem:[%s2 + $0x168] sm:$0xff]
          %v1519 = vld [vmem:[%s2 + $0x170] sm:$0xff]
          %v1520 = vld [vmem:[%s2 + $0x178] sm:$0xff]
          %v1521 = vld [vmem:[%s2 + $0x180] sm:$0xff]
          %v1522 = vld [vmem:[%s2 + $0x188] sm:$0xff]
          %v1523 = vld [vmem:[%s2 + $0x190] sm:$0xff]
          %v1524 = vld [vmem:[%s2 + $0x198] sm:$0xff]
          %v1525 = vld [vmem:[%s2 + $0x1a0] sm:$0xff]
          %v1526 = vld [vmem:[%s2 + $0x1a8] sm:$0xff]
          %v1527 = vld [vmem:[%s2 + $0x1b0] sm:$0xff]
          %v1528 = vld [vmem:[%s2 + $0x1b8] sm:$0xff]
          %v1529 = vld [vmem:[%s2 + $0x1c0] sm:$0xff]
          %v1530 = vld [vmem:[%s2 + $0x1c8] sm:$0xff]
          %v1531 = vld [vmem:[%s2 + $0x1d0] sm:$0xff]
          %v1532 = vld [vmem:[%s2 + $0x1d8] sm:$0xff]
          %v1533 = vld [vmem:[%s2 + $0x1e0] sm:$0xff]
          %v1534 = vld [vmem:[%s2 + $0x1e8] sm:$0xff]
          %v1535 = vld [vmem:[%s2 + $0x1f0] sm:$0xff]
          %v1536 = vld [vmem:[%s2 + $0x1f8] sm:$0xff]
          %v1537 = vld [vmem:[%s3] sm:$0x3]
          %v1539 = vlaneseq
          %v1540 = vshrl.u32 %v1539, 7
          %v1541 = vsub.s32 0, %v1540
          %v1542 = vrot.slane %v1537, %v1541
          %v1543 = vlaneseq
          %v1544 = vshrl.u32 %v1543, 7
          %v1545 = vsub.s32 1, %v1544
          %v1546 = vrot.slane %v1537, %v1545
          %1549 = vmatprep.subr.mxu0 %v1504
          %1550 = vmatpush1.msra.mxu0 %v1503
          %1551 = vmatprep.subr.mxu0 %v1502
          %1552 = vmatpush1.msra.mxu0 %v1501
          %1553 = vmatprep.subr.mxu0 %v1500
          %1554 = vmatpush1.msra.mxu0 %v1499
          %1555 = vmatprep.subr.mxu0 %v1498
          %1556 = vmatpush1.msra.mxu0 %v1497
          %1557 = vmatprep.subr.mxu0 %v1496
          %1558 = vmatpush1.msra.mxu0 %v1495
          %1559 = vmatprep.subr.mxu0 %v1494
          %1560 = vmatpush1.msra.mxu0 %v1493
          %1561 = vmatprep.subr.mxu0 %v1492
          %1562 = vmatpush1.msra.mxu0 %v1491
          %1563 = vmatprep.subr.mxu0 %v1490
          %1564 = vmatpush1.msra.mxu0 %v1489
          %1565 = vmatprep.subr.mxu0 %v1488
          %1566 = vmatpush1.msra.mxu0 %v1487
          %1567 = vmatprep.subr.mxu0 %v1486
          %1568 = vmatpush1.msra.mxu0 %v1485
          %1569 = vmatprep.subr.mxu0 %v1484
          %1570 = vmatpush1.msra.mxu0 %v1483
          %1571 = vmatprep.subr.mxu0 %v1482
          %1572 = vmatpush1.msra.mxu0 %v1481
          %1573 = vmatprep.subr.mxu0 %v1480
          %1574 = vmatpush1.msra.mxu0 %v1479
          %1575 = vmatprep.subr.mxu0 %v1478
          %1576 = vmatpush1.msra.mxu0 %v1477
          %1577 = vmatprep.subr.mxu0 %v1476
          %1578 = vmatpush1.msra.mxu0 %v1475
          %1579 = vmatprep.subr.mxu0 %v1474
          %1580 = vmatpush1.msra.mxu0 %v1473
          %1581 = vmatprep.subr.mxu0 %v1536
          %1582 = vmatpush2.msra.mxu0 %v1535
          %1583 = vmatprep.subr.mxu0 %v1534
          %1584 = vmatpush2.msra.mxu0 %v1533
          %1585 = vmatprep.subr.mxu0 %v1532
          %1586 = vmatpush2.msra.mxu0 %v1531
          %1587 = vmatprep.subr.mxu0 %v1530
          %1588 = vmatpush2.msra.mxu0 %v1529
          %1589 = vmatprep.subr.mxu0 %v1528
          %1590 = vmatpush2.msra.mxu0 %v1527
          %1591 = vmatprep.subr.mxu0 %v1526
          %1592 = vmatpush2.msra.mxu0 %v1525
          %1593 = vmatprep.subr.mxu0 %v1524
          %1594 = vmatpush2.msra.mxu0 %v1523
          %1595 = vmatprep.subr.mxu0 %v1522
          %1596 = vmatpush2.msra.mxu0 %v1521
          %1597 = vmatprep.subr.mxu0 %v1520
          %1598 = vmatpush2.msra.mxu0 %v1519
          %1599 = vmatprep.subr.mxu0 %v1518
          %1600 = vmatpush2.msra.mxu0 %v1517
          %1601 = vmatprep.subr.mxu0 %v1516
          %1602 = vmatpush2.msra.mxu0 %v1515
          %1603 = vmatprep.subr.mxu0 %v1514
          %1604 = vmatpush2.msra.mxu0 %v1513
          %1605 = vmatprep.subr.mxu0 %v1512
          %1606 = vmatpush2.msra.mxu0 %v1511
          %1607 = vmatprep.subr.mxu0 %v1510
          %1608 = vmatpush2.msra.mxu0 %v1509
          %1609 = vmatprep.subr.mxu0 %v1508
          %1610 = vmatpush2.msra.mxu0 %v1507
          %1611 = vmatprep.subr.mxu0 %v1506
          %1612 = vmatpush2.msra.mxu0 %v1505
          %1613 = vmatprep.mubr.f32.mxu0 %v1472
          %1614 = vmatmul.mubr.f32.gmra.mxu0 %v1471
          %v1615 = vpop.f32.mrf.mxu0
          %v1616 = vadd.f32 %v1542, %v1615
          %v1617 = vpop.f32.mrf.mxu0
          %v1618 = vadd.f32 %v1546, %v1617
          %1619 = vdwg.mxu0
          %1620 = vst [vmem:[%s202] sm:$0xff] %v1616
          %1621 = vst [vmem:[%s202 + $0x8] sm:$0xff] %v1618
        $region44: #{multi_head_attention.1} parent=35 // pred_fallthru
          _
        %s1622 = sand.u32 %s127, 1
        %s1623 = scalar_lea.sflag [#allocation7], %s1622
        %s1624 = sand.u32 %s127, 1
        %s1625 = smul.addr %s1624, 16
        %s1626 = scalar_lea.vmem [#allocation6], %s1625
        // Predicated region
        $region45: #{multi_head_attention.1} parent=35 // pred_check
          %p1627 = pneg %p137
        $region46: #{multi_head_attention.1} parent=35 // pred_check_branch
          %1629 = sbr.rel (%p1627) target = $region48
        $region47: #{multi_head_attention.1} parent=35 // pred_region
          %s1631 = ssub.s32 256, 256
          %1632 = vsyncadd %s1623, %s1631
          %s1633 = smul.addr %s22, 2
          %s1634 = smul.addr %s1633, 128
          %s1635 = scalar_lea.hbm %s4, %s1634
          %s1637 = sshll.u32 %s1626, 4
          %s1638 = int_to_ptr.vmem [resolvable:$true] %s1637
          %1640 = dma.vmem_to_hbm [thread:$0]  %s1638, 256, %s1635, %s1623
        $region48: #{multi_head_attention.1} parent=35 // pred_fallthru
          _
      $region36: #{multi_head_attention.1} parent=5 // pred_fallthru
        _
      %p1641 = scmp.le.s32.totalorder 2, %s13
      // Predicated region
      $region49: #{multi_head_attention.1} parent=5 // pred_check
        %p1642 = pneg %p1641
      $region50: #{multi_head_attention.1} parent=5 // pred_check_branch
        %1644 = sbr.rel (%p1642) target = $region52
      $region51: #{multi_head_attention.1} parent=5 // pred_region
        %s1645 = ssub.s32 %s13, 2
        // Predicated region
        $region53: #{multi_head_attention.1} parent=51 // pred_check
          %p1646 = pneg %p143
        $region54: #{multi_head_attention.1} parent=51 // pred_check_branch
          %1648 = sbr.rel (%p1646) target = $region56
        $region55: #{multi_head_attention.1} parent=51 // pred_region
          %s1649 = sand.u32 %s128, 1
          %s1650 = scalar_lea.sflag [#allocation7], %s1649
          %s1651 = sand.u32 %s128, 1
          %s1652 = smul.addr %s1651, 16
          %s1653 = scalar_lea.vmem [#allocation6], %s1652
          %1654 = dma.done %s1650, 256
        $region56: #{multi_head_attention.1} parent=51 // pred_fallthru
          _
      $region52: #{multi_head_attention.1} parent=5 // pred_fallthru
        _
    $region6: #{multi_head_attention.1} parent=1 // loop_footer
      %s17 = sadd.s32 1, %s13
    $region7: #{multi_head_attention.1} parent=1 // loop_footer_branch
      %12 = sbr.rel target = $region3
    $region8: #{multi_head_attention.1} parent=1 // loop_exit
      _
    %1655 = vsyncpa [#allocation7], 1
    %s1656 = scalar_lea.sflag [#allocation7], 1
    %1657 = vsyncpa %s1656, 1

</llo_original>
